<compile_context>
chip_gen: v5e
topology: v5e:2x2
jax: 0.10.0
libtpu: 0.0.40
codegen_flags: <defaults>
</compile_context>

<pallas_src>
import functools
import math

import jax
import jax.numpy as jnp
from jax.experimental import pallas as pl
from jax.experimental.pallas import tpu as pltpu


# ---------------------------------------------------------------------------
# helpers
# ---------------------------------------------------------------------------
def _layer_norm(x, gamma, beta, eps=1e-5):
    """LayerNorm over the last axis (PyTorch semantics, biased variance)."""
    mu = jnp.mean(x, axis=-1, keepdims=True)
    var = jnp.mean(jnp.square(x - mu), axis=-1, keepdims=True)
    return (x - mu) * jax.lax.rsqrt(var + eps) * gamma + beta


# ---------------------------------------------------------------------------
# Fused encoder-layer kernel (fused QKV matmul + vectorized MHA + LN + MLP + LN)
# ---------------------------------------------------------------------------
def _dp_encoder_layer_kernel(x_ref, wqkv_ref, bqkv_ref, wo_ref, bo_ref,
                             g1_ref, be1_ref, w1_ref, bf1_ref,
                             w2_ref, bf2_ref, g2_ref, be2_ref,
                             out_ref, *, seq_len, batch, num_heads):
    x = x_ref[...]                                  # (L*N, D) flat token slab
    L, N = seq_len, batch
    D = x.shape[-1]
    hd = D // num_heads
    scale = 1.0 / math.sqrt(hd)

    # --- fused Q/K/V projection: one (L*N, D) @ (D, 3D) matmul ---
    qkv = jnp.dot(x, wqkv_ref[...], preferred_element_type=jnp.float32) + bqkv_ref[...]
    q = qkv[:, 0 * D:1 * D] * scale                 # fold 1/sqrt(hd) into Q (cheaper
    k = qkv[:, 1 * D:2 * D]                         # than scaling the LxL score tile)
    v = qkv[:, 2 * D:3 * D]

    # --- vectorized multi-head attention (attend along the sequence axis L) ---
    def split_heads(t):                             # (L*N, D) -> (N*H, L, hd)
        return (t.reshape(L, N, num_heads, hd)
                 .transpose(1, 2, 0, 3)
                 .reshape(N * num_heads, L, hd))

    qh, kh, vh = split_heads(q), split_heads(k), split_heads(v)

    # leading-batch dot_general: (N*H, L, hd) x (N*H, L, hd) -> (N*H, L, L)
    s = jnp.einsum('bld,bmd->blm', qh, kh, preferred_element_type=jnp.float32)
    s = s - jnp.max(s, axis=-1, keepdims=True)                       # XLU reduce
    e = jnp.exp(s)                                                   # EUP
    p = e * pl.reciprocal(jnp.sum(e, axis=-1, keepdims=True), approx=True)  # EUP
    ctx = jnp.einsum('blm,bmd->bld', p, vh,
                     preferred_element_type=jnp.float32)             # (N*H, L, hd)
    ctx = (ctx.reshape(N, num_heads, L, hd)
              .transpose(2, 0, 1, 3)
              .reshape(L * N, D))                                    # back to flat slab

    attn_out = jnp.dot(ctx, wo_ref[...], preferred_element_type=jnp.float32) + bo_ref[...]

    # --- residual + norm1 ---
    src = _layer_norm(x + attn_out, g1_ref[...], be1_ref[...])

    # --- feed-forward (ReLU) + residual + norm2 ---
    h1 = jnp.maximum(
        jnp.dot(src, w1_ref[...], preferred_element_type=jnp.float32) + bf1_ref[...], 0.0)
    ff = jnp.dot(h1, w2_ref[...], preferred_element_type=jnp.float32) + bf2_ref[...]
    out_ref[...] = _layer_norm(src + ff, g2_ref[...], be2_ref[...])


def dp_transformer_encoder_layer(src, params, *, num_heads):
    """src: (L, N, D) float32 — torch.nn.MultiheadAttention (seq, batch, embed) layout."""
    L, N, D = src.shape
    assert D % num_heads == 0
    x2d = src.reshape(L * N, D)                     # lane-friendly flat token slab
    names = ["wqkv", "bqkv", "wo", "bo", "g1", "be1",
             "w1", "bf1", "w2", "bf2", "g2", "be2"]
    args = [params[n] for n in names]
    vmem = pl.BlockSpec(memory_space=pltpu.MemorySpace.VMEM)
    out2d = pl.pallas_call(
        functools.partial(_dp_encoder_layer_kernel,
                          seq_len=L, batch=N, num_heads=num_heads),
        out_shape=jax.ShapeDtypeStruct((L * N, D), jnp.float32),
        in_specs=[vmem] * (1 + len(args)),
        out_specs=vmem,
    )(x2d, *args)
    return out2d.reshape(L, N, D)


# ---------------------------------------------------------------------------
# Parameter setup (deterministic; QKV pre-fused into a (D, 3D) weight)
# ---------------------------------------------------------------------------
def init_params(key, *, d_model, dim_feedforward):
    D, F = d_model, dim_feedforward

    def nrm(k, shape, scale=0.02):
        return scale * jax.random.normal(k, shape, jnp.float32)

    k = jax.random.split(key, 12)
    wq, wk, wv = nrm(k[0], (D, D)), nrm(k[1], (D, D)), nrm(k[2], (D, D))
    bq, bk, bv = nrm(k[3], (D,)), nrm(k[4], (D,)), nrm(k[5], (D,))
    params = {
        # fused QKV: x @ W, W = [Wq | Wk | Wv]  -> (D, 3D)
        "wqkv": jnp.concatenate([wq, wk, wv], axis=1),
        "bqkv": jnp.concatenate([bq, bk, bv]).reshape(1, 3 * D),
        "wo": nrm(k[6], (D, D)), "bo": nrm(k[7], (D,)).reshape(1, D),
        "g1": jnp.ones((1, D), jnp.float32), "be1": jnp.zeros((1, D), jnp.float32),
        "w1": nrm(k[8], (D, F)), "bf1": nrm(k[9], (F,)).reshape(1, F),
        "w2": nrm(k[10], (F, D)), "bf2": nrm(k[11], (D,)).reshape(1, D),
        "g2": jnp.ones((1, D), jnp.float32), "be2": jnp.zeros((1, D), jnp.float32),
    }
    return params


# ---------------------------------------------------------------------------
# Pure-JAX reference (correctness check against the kernel)
# ---------------------------------------------------------------------------
def _reference(src, params, *, num_heads):
    L, N, D = src.shape
    hd = D // num_heads
    x = src.reshape(L * N, D)
    qkv = x @ params["wqkv"] + params["bqkv"]
    q, k, v = qkv[:, :D], qkv[:, D:2 * D], qkv[:, 2 * D:]

    def sh(t):
        return t.reshape(L, N, num_heads, hd).transpose(1, 2, 0, 3)

    s = jnp.einsum('nhld,nhmd->nhlm', sh(q), sh(k)) / math.sqrt(hd)
    p = jax.nn.softmax(s, axis=-1)
    ctx = jnp.einsum('nhlm,nhmd->nhld', p, sh(v))
    ctx = ctx.transpose(2, 0, 1, 3).reshape(L * N, D)
    attn = ctx @ params["wo"] + params["bo"]

    def ln(y, g, b):
        mu = y.mean(-1, keepdims=True)
        var = ((y - mu) ** 2).mean(-1, keepdims=True)
        return (y - mu) / jnp.sqrt(var + 1e-5) * g + b

    y = ln(x + attn, params["g1"], params["be1"])
    h = jnp.maximum(y @ params["w1"] + params["bf1"], 0.0)
    y = ln(y + h @ params["w2"] + params["bf2"], params["g2"], params["be2"])
    return y.reshape(L, N, D)


# ---------------------------------------------------------------------------
if __name__ == "__main__":
    # small config consistent with the module: src is (seq, batch, d_model)
    SEQ, BATCH, D_MODEL, NHEAD, FFN = 8, 2, 32, 4, 64

    key = jax.random.PRNGKey(0)
    kp, kx = jax.random.split(key)
    params = init_params(kp, d_model=D_MODEL, dim_feedforward=FFN)
    src = jax.random.normal(kx, (SEQ, BATCH, D_MODEL), jnp.float32)

    out = dp_transformer_encoder_layer(src, params, num_heads=NHEAD)
    out = jax.block_until_ready(out)

    assert out.shape == (SEQ, BATCH, D_MODEL) and out.dtype == jnp.float32
    assert bool(jnp.all(jnp.isfinite(out)))
    # loose tolerance: kernel uses the approximate (EUP) reciprocal in softmax
    ref = _reference(src, params, num_heads=NHEAD)
    assert bool(jnp.allclose(out, ref, rtol=1e-2, atol=1e-2))
    print("KERNEL_OK")
</pallas_src>

<mosaic_0001>
module attributes {stable_mosaic.version = 11 : i64} {
  func.func @_dp_encoder_layer_kernel(%arg0: memref<16x32xf32, #tpu.memory_space<vmem>>, %arg1: memref<32x96xf32, #tpu.memory_space<vmem>>, %arg2: memref<1x96xf32, #tpu.memory_space<vmem>>, %arg3: memref<32x32xf32, #tpu.memory_space<vmem>>, %arg4: memref<1x32xf32, #tpu.memory_space<vmem>>, %arg5: memref<1x32xf32, #tpu.memory_space<vmem>>, %arg6: memref<1x32xf32, #tpu.memory_space<vmem>>, %arg7: memref<32x64xf32, #tpu.memory_space<vmem>>, %arg8: memref<1x64xf32, #tpu.memory_space<vmem>>, %arg9: memref<64x32xf32, #tpu.memory_space<vmem>>, %arg10: memref<1x32xf32, #tpu.memory_space<vmem>>, %arg11: memref<1x32xf32, #tpu.memory_space<vmem>>, %arg12: memref<1x32xf32, #tpu.memory_space<vmem>>, %arg13: memref<16x32xf32, #tpu.memory_space<vmem>>) attributes {dimension_semantics = [], scalar_prefetch = 0 : i64, scratch_operands = 0 : i64, tpu.core_type = #tpu.core_type<tc>} {
    %c0 = arith.constant 0 : index
    %c0_0 = arith.constant 0 : index
    %0 = vector.load %arg0[%c0, %c0_0] : memref<16x32xf32, #tpu.memory_space<vmem>>, vector<16x32xf32>
    %c0_1 = arith.constant 0 : index
    %c0_2 = arith.constant 0 : index
    %1 = vector.load %arg1[%c0_1, %c0_2] : memref<32x96xf32, #tpu.memory_space<vmem>>, vector<32x96xf32>
    %cst = arith.constant dense<0.000000e+00> : vector<16x96xf32>
    %2 = tpu.matmul %0, %1, %cst {dimension_numbers = #tpu.dot_dimension_numbers<[1], [0], [0], [1], [0, 0, 1, 1], [], []>} : vector<16x32xf32>, vector<32x96xf32>, vector<16x96xf32> -> vector<16x96xf32>
    %c0_3 = arith.constant 0 : index
    %c0_4 = arith.constant 0 : index
    %3 = vector.load %arg2[%c0_3, %c0_4] : memref<1x96xf32, #tpu.memory_space<vmem>>, vector<1x96xf32>
    %4 = vector.broadcast %3 : vector<1x96xf32> to vector<16x96xf32>
    %5 = arith.addf %2, %4 : vector<16x96xf32>
    %6 = vector.extract_strided_slice %5 {offsets = [0, 0], sizes = [16, 32], strides = [1, 1]} : vector<16x96xf32> to vector<16x32xf32>
    %cst_5 = arith.constant 0.353553385 : f32
    %7 = vector.broadcast %cst_5 : f32 to vector<16x32xf32>
    %8 = arith.mulf %6, %7 : vector<16x32xf32>
    %9 = vector.extract_strided_slice %5 {offsets = [0, 32], sizes = [16, 32], strides = [1, 1]} : vector<16x96xf32> to vector<16x32xf32>
    %10 = vector.extract_strided_slice %5 {offsets = [0, 64], sizes = [16, 32], strides = [1, 1]} : vector<16x96xf32> to vector<16x32xf32>
    %11 = vector.shape_cast %8 : vector<16x32xf32> to vector<8x2x4x8xf32>
    %12 = tpu.transpose %11, [1, 2, 0, 3] : vector<8x2x4x8xf32> -> vector<2x4x8x8xf32>
    %13 = vector.shape_cast %12 : vector<2x4x8x8xf32> to vector<8x8x8xf32>
    %14 = vector.shape_cast %9 : vector<16x32xf32> to vector<8x2x4x8xf32>
    %15 = tpu.transpose %14, [1, 2, 0, 3] : vector<8x2x4x8xf32> -> vector<2x4x8x8xf32>
    %16 = vector.shape_cast %15 : vector<2x4x8x8xf32> to vector<8x8x8xf32>
    %17 = vector.shape_cast %10 : vector<16x32xf32> to vector<8x2x4x8xf32>
    %18 = tpu.transpose %17, [1, 2, 0, 3] : vector<8x2x4x8xf32> -> vector<2x4x8x8xf32>
    %19 = vector.shape_cast %18 : vector<2x4x8x8xf32> to vector<8x8x8xf32>
    "tpu.trace_start"() <{level = 10 : i32, message = "bld,bmd->blm"}> : () -> ()
    %cst_6 = arith.constant dense<0.000000e+00> : vector<8x8x8xf32>
    %20 = tpu.matmul %13, %16, %cst_6 {dimension_numbers = #tpu.dot_dimension_numbers<[2], [2], [1], [1], [0, 0, 0, 1, 1, 1], [0], [0]>} : vector<8x8x8xf32>, vector<8x8x8xf32>, vector<8x8x8xf32> -> vector<8x8x8xf32>
    "tpu.trace_stop"() : () -> ()
    %cst_7 = arith.constant dense<0xFF800000> : vector<8x8xf32>
    %21 = vector.multi_reduction <maximumf>, %20, %cst_7 [2] : vector<8x8x8xf32> to vector<8x8xf32>
    %22 = vector.shape_cast %21 : vector<8x8xf32> to vector<8x8x1xf32>
    %23 = vector.broadcast %22 : vector<8x8x1xf32> to vector<8x8x8xf32>
    %24 = arith.subf %20, %23 : vector<8x8x8xf32>
    %25 = math.exp %24 : vector<8x8x8xf32>
    %cst_8 = arith.constant dense<0.000000e+00> : vector<8x8xf32>
    %26 = vector.multi_reduction <add>, %25, %cst_8 [2] : vector<8x8x8xf32> to vector<8x8xf32>
    %27 = vector.shape_cast %26 : vector<8x8xf32> to vector<8x8x1xf32>
    %28 = tpu.reciprocal %27 {approx = true} : vector<8x8x1xf32> -> vector<8x8x1xf32>
    %29 = vector.broadcast %28 : vector<8x8x1xf32> to vector<8x8x8xf32>
    %30 = arith.mulf %25, %29 : vector<8x8x8xf32>
    "tpu.trace_start"() <{level = 10 : i32, message = "blm,bmd->bld"}> : () -> ()
    %cst_9 = arith.constant dense<0.000000e+00> : vector<8x8x8xf32>
    %31 = tpu.matmul %30, %19, %cst_9 {dimension_numbers = #tpu.dot_dimension_numbers<[2], [1], [1], [2], [0, 0, 0, 1, 1, 2], [0], [0]>} : vector<8x8x8xf32>, vector<8x8x8xf32>, vector<8x8x8xf32> -> vector<8x8x8xf32>
    "tpu.trace_stop"() : () -> ()
    %32 = vector.shape_cast %31 : vector<8x8x8xf32> to vector<2x4x8x8xf32>
    %33 = tpu.transpose %32, [2, 0, 1, 3] : vector<2x4x8x8xf32> -> vector<8x2x4x8xf32>
    %34 = vector.shape_cast %33 : vector<8x2x4x8xf32> to vector<16x32xf32>
    %c0_10 = arith.constant 0 : index
    %c0_11 = arith.constant 0 : index
    %35 = vector.load %arg3[%c0_10, %c0_11] : memref<32x32xf32, #tpu.memory_space<vmem>>, vector<32x32xf32>
    %cst_12 = arith.constant dense<0.000000e+00> : vector<16x32xf32>
    %36 = tpu.matmul %34, %35, %cst_12 {dimension_numbers = #tpu.dot_dimension_numbers<[1], [0], [0], [1], [0, 0, 1, 1], [], []>} : vector<16x32xf32>, vector<32x32xf32>, vector<16x32xf32> -> vector<16x32xf32>
    %c0_13 = arith.constant 0 : index
    %c0_14 = arith.constant 0 : index
    %37 = vector.load %arg4[%c0_13, %c0_14] : memref<1x32xf32, #tpu.memory_space<vmem>>, vector<1x32xf32>
    %38 = vector.broadcast %37 : vector<1x32xf32> to vector<16x32xf32>
    %39 = arith.addf %36, %38 : vector<16x32xf32>
    %40 = arith.addf %0, %39 : vector<16x32xf32>
    %c0_15 = arith.constant 0 : index
    %c0_16 = arith.constant 0 : index
    %41 = vector.load %arg5[%c0_15, %c0_16] : memref<1x32xf32, #tpu.memory_space<vmem>>, vector<1x32xf32>
    %c0_17 = arith.constant 0 : index
    %c0_18 = arith.constant 0 : index
    %42 = vector.load %arg6[%c0_17, %c0_18] : memref<1x32xf32, #tpu.memory_space<vmem>>, vector<1x32xf32>
    %cst_19 = arith.constant dense<0.000000e+00> : vector<16xf32>
    %43 = vector.multi_reduction <add>, %40, %cst_19 [1] : vector<16x32xf32> to vector<16xf32>
    %44 = vector.shape_cast %43 : vector<16xf32> to vector<16x1xf32>
    %cst_20 = arith.constant 3.200000e+01 : f32
    %45 = vector.broadcast %cst_20 : f32 to vector<16x1xf32>
    %46 = arith.divf %44, %45 : vector<16x1xf32>
    %47 = vector.broadcast %46 : vector<16x1xf32> to vector<16x32xf32>
    %48 = arith.subf %40, %47 : vector<16x32xf32>
    %49 = arith.mulf %48, %48 : vector<16x32xf32>
    %cst_21 = arith.constant dense<0.000000e+00> : vector<16xf32>
    %50 = vector.multi_reduction <add>, %49, %cst_21 [1] : vector<16x32xf32> to vector<16xf32>
    %51 = vector.shape_cast %50 : vector<16xf32> to vector<16x1xf32>
    %cst_22 = arith.constant 3.200000e+01 : f32
    %52 = vector.broadcast %cst_22 : f32 to vector<16x1xf32>
    %53 = arith.divf %51, %52 : vector<16x1xf32>
    %54 = vector.broadcast %46 : vector<16x1xf32> to vector<16x32xf32>
    %55 = arith.subf %40, %54 : vector<16x32xf32>
    %cst_23 = arith.constant 9.99999974E-6 : f32
    %56 = vector.broadcast %cst_23 : f32 to vector<16x1xf32>
    %57 = arith.addf %53, %56 : vector<16x1xf32>
    %58 = math.rsqrt %57 : vector<16x1xf32>
    %59 = vector.broadcast %58 : vector<16x1xf32> to vector<16x32xf32>
    %60 = arith.mulf %55, %59 : vector<16x32xf32>
    %61 = vector.broadcast %41 : vector<1x32xf32> to vector<16x32xf32>
    %62 = arith.mulf %60, %61 : vector<16x32xf32>
    %63 = vector.broadcast %42 : vector<1x32xf32> to vector<16x32xf32>
    %64 = arith.addf %62, %63 : vector<16x32xf32>
    %c0_24 = arith.constant 0 : index
    %c0_25 = arith.constant 0 : index
    %65 = vector.load %arg7[%c0_24, %c0_25] : memref<32x64xf32, #tpu.memory_space<vmem>>, vector<32x64xf32>
    %cst_26 = arith.constant dense<0.000000e+00> : vector<16x64xf32>
    %66 = tpu.matmul %64, %65, %cst_26 {dimension_numbers = #tpu.dot_dimension_numbers<[1], [0], [0], [1], [0, 0, 1, 1], [], []>} : vector<16x32xf32>, vector<32x64xf32>, vector<16x64xf32> -> vector<16x64xf32>
    %c0_27 = arith.constant 0 : index
    %c0_28 = arith.constant 0 : index
    %67 = vector.load %arg8[%c0_27, %c0_28] : memref<1x64xf32, #tpu.memory_space<vmem>>, vector<1x64xf32>
    %68 = vector.broadcast %67 : vector<1x64xf32> to vector<16x64xf32>
    %69 = arith.addf %66, %68 : vector<16x64xf32>
    %cst_29 = arith.constant 0.000000e+00 : f32
    %70 = vector.broadcast %cst_29 : f32 to vector<16x64xf32>
    %71 = arith.maximumf %69, %70 : vector<16x64xf32>
    %c0_30 = arith.constant 0 : index
    %c0_31 = arith.constant 0 : index
    %72 = vector.load %arg9[%c0_30, %c0_31] : memref<64x32xf32, #tpu.memory_space<vmem>>, vector<64x32xf32>
    %cst_32 = arith.constant dense<0.000000e+00> : vector<16x32xf32>
    %73 = tpu.matmul %71, %72, %cst_32 {dimension_numbers = #tpu.dot_dimension_numbers<[1], [0], [0], [1], [0, 0, 1, 1], [], []>} : vector<16x64xf32>, vector<64x32xf32>, vector<16x32xf32> -> vector<16x32xf32>
    %c0_33 = arith.constant 0 : index
    %c0_34 = arith.constant 0 : index
    %74 = vector.load %arg10[%c0_33, %c0_34] : memref<1x32xf32, #tpu.memory_space<vmem>>, vector<1x32xf32>
    %75 = vector.broadcast %74 : vector<1x32xf32> to vector<16x32xf32>
    %76 = arith.addf %73, %75 : vector<16x32xf32>
    %77 = arith.addf %64, %76 : vector<16x32xf32>
    %c0_35 = arith.constant 0 : index
    %c0_36 = arith.constant 0 : index
    %78 = vector.load %arg11[%c0_35, %c0_36] : memref<1x32xf32, #tpu.memory_space<vmem>>, vector<1x32xf32>
    %c0_37 = arith.constant 0 : index
    %c0_38 = arith.constant 0 : index
    %79 = vector.load %arg12[%c0_37, %c0_38] : memref<1x32xf32, #tpu.memory_space<vmem>>, vector<1x32xf32>
    %cst_39 = arith.constant dense<0.000000e+00> : vector<16xf32>
    %80 = vector.multi_reduction <add>, %77, %cst_39 [1] : vector<16x32xf32> to vector<16xf32>
    %81 = vector.shape_cast %80 : vector<16xf32> to vector<16x1xf32>
    %cst_40 = arith.constant 3.200000e+01 : f32
    %82 = vector.broadcast %cst_40 : f32 to vector<16x1xf32>
    %83 = arith.divf %81, %82 : vector<16x1xf32>
    %84 = vector.broadcast %83 : vector<16x1xf32> to vector<16x32xf32>
    %85 = arith.subf %77, %84 : vector<16x32xf32>
    %86 = arith.mulf %85, %85 : vector<16x32xf32>
    %cst_41 = arith.constant dense<0.000000e+00> : vector<16xf32>
    %87 = vector.multi_reduction <add>, %86, %cst_41 [1] : vector<16x32xf32> to vector<16xf32>
    %88 = vector.shape_cast %87 : vector<16xf32> to vector<16x1xf32>
    %cst_42 = arith.constant 3.200000e+01 : f32
    %89 = vector.broadcast %cst_42 : f32 to vector<16x1xf32>
    %90 = arith.divf %88, %89 : vector<16x1xf32>
    %91 = vector.broadcast %83 : vector<16x1xf32> to vector<16x32xf32>
    %92 = arith.subf %77, %91 : vector<16x32xf32>
    %cst_43 = arith.constant 9.99999974E-6 : f32
    %93 = vector.broadcast %cst_43 : f32 to vector<16x1xf32>
    %94 = arith.addf %90, %93 : vector<16x1xf32>
    %95 = math.rsqrt %94 : vector<16x1xf32>
    %96 = vector.broadcast %95 : vector<16x1xf32> to vector<16x32xf32>
    %97 = arith.mulf %92, %96 : vector<16x32xf32>
    %98 = vector.broadcast %78 : vector<1x32xf32> to vector<16x32xf32>
    %99 = arith.mulf %97, %98 : vector<16x32xf32>
    %100 = vector.broadcast %79 : vector<1x32xf32> to vector<16x32xf32>
    %101 = arith.addf %99, %100 : vector<16x32xf32>
    %c0_44 = arith.constant 0 : index
    %c0_45 = arith.constant 0 : index
    %102 = vector.load %arg13[%c0_44, %c0_45] : memref<16x32xf32, #tpu.memory_space<vmem>>, vector<16x32xf32>
    tpu.vector_store %arg13[%c0_44, %c0_45], %101 {strides = array<i32>} : memref<16x32xf32, #tpu.memory_space<vmem>>, vector<16x32xf32>,
    return
  }
}

</mosaic_0001>

<llo_original>
// kernel: tpu_custom_call.1
$region0: #{tpu_custom_call.1}
  #allocation0 [shape = 'u32[]', space=smem, size = 0x4, offset = 0x4, fixed_abs, tag = 'smem constant byte address 0x4 - core index']
  #allocation1 [shape = 'u32[72,128]{1,0:T(1,128)}', space=vmem, size = 0x9000, scoped, tag = 'internal scratch']
  %s0 = inlined_call_operand.hbm [shape: f32[16,32], index: 0, kind: input, shape index: {}]
  %s1 = inlined_call_operand.vmem [shape: f32[32,96], index: 1, kind: input, shape index: {}]
  %s2 = inlined_call_operand.vmem [shape: f32[1,96], index: 2, kind: input, shape index: {}]
  %s3 = inlined_call_operand.vmem [shape: f32[32,32], index: 3, kind: input, shape index: {}]
  %s4 = inlined_call_operand.vmem [shape: f32[1,32], index: 4, kind: input, shape index: {}]
  %s5 = inlined_call_operand.vmem [shape: f32[1,32], index: 5, kind: input, shape index: {}]
  %s6 = inlined_call_operand.vmem [shape: f32[1,32], index: 6, kind: input, shape index: {}]
  %s7 = inlined_call_operand.vmem [shape: f32[32,64], index: 7, kind: input, shape index: {}]
  %s8 = inlined_call_operand.vmem [shape: f32[1,64], index: 8, kind: input, shape index: {}]
  %s9 = inlined_call_operand.vmem [shape: f32[64,32], index: 9, kind: input, shape index: {}]
  %s10 = inlined_call_operand.vmem [shape: f32[1,32], index: 10, kind: input, shape index: {}]
  %s11 = inlined_call_operand.vmem [shape: f32[1,32], index: 11, kind: input, shape index: {}]
  %s12 = inlined_call_operand.vmem [shape: f32[1,32], index: 12, kind: input, shape index: {}]
  %s13 = inlined_call_operand.hbm [shape: f32[16,32], index: 13, kind: output, shape index: {}]
  %s14 = sld [smem:[#allocation0]]
  $region66: #{tpu_custom_call.1} parent=0
    _
  %s16 = ssub.s32 1, %s14
  %s17 = scalar_select 0, %s16, %s14
  $region1: #{tpu_custom_call.1} parent=0
    #allocation2 [shape = 'u8[8192]{0}', space=vmem, size = 0x2000, scoped, tag = 'input window, operand 0, single buffered']
    #allocation3 [shape = 's32[1]{0}', space=sflag, size = 0x4, scoped, tag = 'scoped memory for tpu_custom_call.1']
    #allocation4 [shape = 's32[1]{0}', space=sflag, size = 0x4, scoped, tag = 'scoped memory for tpu_custom_call.1']
    #allocation5 [shape = 'u8[8192]{0}', space=vmem, size = 0x2000, scoped, tag = 'output window, operand 0, single buffered']
    %18 = vsyncpa [#allocation3], 0
    %19 = vsyncpa [#allocation4], 0
    // Predicated region
    $region2: #{tpu_custom_call.1} parent=1 // pred_check
      _
    $region3: #{tpu_custom_call.1} parent=1 // pred_check_branch
      %21 = sbr.rel (0) target = $region5
    $region4: #{tpu_custom_call.1} parent=1 // pred_region
      %23 = vsyncadd [#allocation3], 0
      %s24 = sshll.u32 %s0, 4
      %s25 = int_to_ptr.hbm [resolvable:$true] %s24
      %s26 = sshll.u32 [#allocation2], 4
      %s27 = int_to_ptr.vmem [resolvable:$true] %s26
      %32 = dma.hbm_to_vmem [thread:$0]  %s25, 256, %s27, [#allocation3], 128, 128, 8
    $region5: #{tpu_custom_call.1} parent=1 // pred_fallthru
      _
    // Predicated region
    $region6: #{tpu_custom_call.1} parent=1 // pred_check
      _
    $region7: #{tpu_custom_call.1} parent=1 // pred_check_branch
      %34 = sbr.rel (0) target = $region9
    $region8: #{tpu_custom_call.1} parent=1 // pred_region
      _
    $region9: #{tpu_custom_call.1} parent=1 // pred_fallthru
      _
    // Predicated region
    $region10: #{tpu_custom_call.1} parent=1 // pred_check
      _
    $region11: #{tpu_custom_call.1} parent=1 // pred_check_branch
      %36 = sbr.rel (0) target = $region13
    $region12: #{tpu_custom_call.1} parent=1 // pred_region
      _
    $region13: #{tpu_custom_call.1} parent=1 // pred_fallthru
      _
    // Predicated region
    $region14: #{tpu_custom_call.1} parent=1 // pred_check
      _
    $region15: #{tpu_custom_call.1} parent=1 // pred_check_branch
      %38 = sbr.rel (0) target = $region17
    $region16: #{tpu_custom_call.1} parent=1 // pred_region
      _
    $region17: #{tpu_custom_call.1} parent=1 // pred_fallthru
      _
    // Predicated region
    $region18: #{tpu_custom_call.1} parent=1 // pred_check
      _
    $region19: #{tpu_custom_call.1} parent=1 // pred_check_branch
      %40 = sbr.rel (0) target = $region21
    $region20: #{tpu_custom_call.1} parent=1 // pred_region
      _
    $region21: #{tpu_custom_call.1} parent=1 // pred_fallthru
      _
    // Predicated region
    $region22: #{tpu_custom_call.1} parent=1 // pred_check
      _
    $region23: #{tpu_custom_call.1} parent=1 // pred_check_branch
      %42 = sbr.rel (0) target = $region25
    $region24: #{tpu_custom_call.1} parent=1 // pred_region
      _
    $region25: #{tpu_custom_call.1} parent=1 // pred_fallthru
      _
    // Predicated region
    $region26: #{tpu_custom_call.1} parent=1 // pred_check
      _
    $region27: #{tpu_custom_call.1} parent=1 // pred_check_branch
      %44 = sbr.rel (0) target = $region29
    $region28: #{tpu_custom_call.1} parent=1 // pred_region
      _
    $region29: #{tpu_custom_call.1} parent=1 // pred_fallthru
      _
    // Predicated region
    $region30: #{tpu_custom_call.1} parent=1 // pred_check
      _
    $region31: #{tpu_custom_call.1} parent=1 // pred_check_branch
      %46 = sbr.rel (0) target = $region33
    $region32: #{tpu_custom_call.1} parent=1 // pred_region
      _
    $region33: #{tpu_custom_call.1} parent=1 // pred_fallthru
      _
    // Predicated region
    $region34: #{tpu_custom_call.1} parent=1 // pred_check
      _
    $region35: #{tpu_custom_call.1} parent=1 // pred_check_branch
      %48 = sbr.rel (0) target = $region37
    $region36: #{tpu_custom_call.1} parent=1 // pred_region
      _
    $region37: #{tpu_custom_call.1} parent=1 // pred_fallthru
      _
    // Predicated region
    $region38: #{tpu_custom_call.1} parent=1 // pred_check
      _
    $region39: #{tpu_custom_call.1} parent=1 // pred_check_branch
      %50 = sbr.rel (0) target = $region41
    $region40: #{tpu_custom_call.1} parent=1 // pred_region
      _
    $region41: #{tpu_custom_call.1} parent=1 // pred_fallthru
      _
    // Predicated region
    $region42: #{tpu_custom_call.1} parent=1 // pred_check
      _
    $region43: #{tpu_custom_call.1} parent=1 // pred_check_branch
      %52 = sbr.rel (0) target = $region45
    $region44: #{tpu_custom_call.1} parent=1 // pred_region
      _
    $region45: #{tpu_custom_call.1} parent=1 // pred_fallthru
      _
    // Predicated region
    $region46: #{tpu_custom_call.1} parent=1 // pred_check
      _
    $region47: #{tpu_custom_call.1} parent=1 // pred_check_branch
      %54 = sbr.rel (0) target = $region49
    $region48: #{tpu_custom_call.1} parent=1 // pred_region
      _
    $region49: #{tpu_custom_call.1} parent=1 // pred_fallthru
      _
    // Predicated region
    $region50: #{tpu_custom_call.1} parent=1 // pred_check
      _
    $region51: #{tpu_custom_call.1} parent=1 // pred_check_branch
      %56 = sbr.rel (0) target = $region53
    $region52: #{tpu_custom_call.1} parent=1 // pred_region
      _
    $region53: #{tpu_custom_call.1} parent=1 // pred_fallthru
      _
    // Predicated region
    $region54: #{tpu_custom_call.1} parent=1 // pred_check
      _
    $region55: #{tpu_custom_call.1} parent=1 // pred_check_branch
      %58 = sbr.rel (0) target = $region57
    $region56: #{tpu_custom_call.1} parent=1 // pred_region
      %60 = dma.done [#allocation3], 256
    $region57: #{tpu_custom_call.1} parent=1 // pred_fallthru
      _
    %v61 = vld [vmem:[#allocation2] sm:$0xff]
    %v62 = vld [vmem:[#allocation2 + $0x8] sm:$0xff]
    %v63 = vld [vmem:[%s1] sm:$0xff]
    %v64 = vld [vmem:[%s1 + $0x8] sm:$0xff]
    %v65 = vld [vmem:[%s1 + $0x10] sm:$0xff]
    %v66 = vld [vmem:[%s1 + $0x18] sm:$0xff]
    %v67 = vld [vmem:[%s2] sm:$0x1]
    %v69 = vperm.slane %v67, 0
    %vm71 = vcmask 261120
    %v73 = vsel %vm71, %v61, 0
    %v76 = vsel %vm71, %v62, 0
    %78 = vmatpush.msra.mxu0 0.0
    %79 = vmatpush.msra.mxu0 0.0
    %80 = vmatpush.msra.mxu0 0.0
    %81 = vmatpush.msra.mxu0 0.0
    %82 = vmatpush.msra.mxu0 0.0
    %83 = vmatpush.msra.mxu0 0.0
    %84 = vmatpush.msra.mxu0 0.0
    %85 = vmatpush.msra.mxu0 0.0
    %86 = vmatpush.msra.mxu0 0.0
    %87 = vmatpush.msra.mxu0 0.0
    %88 = vmatpush.msra.mxu0 0.0
    %89 = vmatpush.msra.mxu0 0.0
    %90 = vmatpush.msra.mxu0 %v66
    %91 = vmatpush.msra.mxu0 %v65
    %92 = vmatpush.msra.mxu0 %v64
    %93 = vmatpush.msra.mxu0 %v63
    %94 = vmatmul.f32.gmra.mxu0 %v73
    %v95 = vpop.f32.mrf.mxu0
    %v96 = vadd.f32 %v69, %v95
    %97 = vmatmul.f32.gmra.mxu0 %v76
    %v98 = vpop.f32.mrf.mxu0
    %v99 = vadd.f32 %v69, %v98
    %100 = vdwg.mxu0
    %v101 = vmul.f32 %v96, 0.35355338
    %v102 = vmul.f32 %v99, 0.35355338
    %105 = vrot.lane.b32.xlu0 %v101, 120
    %v106 = vpop.permute.xlu0 %105
    %107 = vrot.lane.b32.xlu0 %v102, 120
    %v108 = vpop.permute.xlu0 %107
    %111 = vrot.lane.b32.xlu0 %v101, 112
    %v112 = vpop.permute.xlu0 %111
    %113 = vrot.lane.b32.xlu0 %v102, 112
    %v114 = vpop.permute.xlu0 %113
    %117 = vrot.lane.b32.xlu0 %v101, 104
    %v118 = vpop.permute.xlu0 %117
    %119 = vrot.lane.b32.xlu0 %v102, 104
    %v120 = vpop.permute.xlu0 %119
    %v123 = vrot.slane %v112, 4
    %vm124 = vcmask 1047556
    %v125 = vsel %vm124, %v123, %v101
    %v126 = vrot.slane %v101, 4
    %v127 = vsel %vm124, %v112, %v126
    %v129 = vunpack.c.l.s4 1983009808
    %v130 = vunpack.c.0.s8 %v129
    %v131 = vperm.slane %v125, %v130
    %v133 = vunpack.c.l.s4 1983009808
    %v134 = vunpack.c.0.s8 %v133
    %v135 = vperm.slane %v127, %v134
    %v136 = vrot.slane %v118, 4
    %v137 = vsel %vm124, %v136, %v106
    %v138 = vrot.slane %v106, 4
    %v139 = vsel %vm124, %v118, %v138
    %v141 = vunpack.c.l.s4 1983009808
    %v142 = vunpack.c.0.s8 %v141
    %v143 = vperm.slane %v137, %v142
    %v145 = vunpack.c.l.s4 1983009808
    %v146 = vunpack.c.0.s8 %v145
    %v147 = vperm.slane %v139, %v146
    %v148 = vrot.slane %v143, 4
    %v149 = vsel %vm124, %v148, %v131
    %v150 = vrot.slane %v131, 4
    %v151 = vsel %vm124, %v143, %v150
    %v153 = vunpack.c.l.s4 1934713408
    %v154 = vunpack.c.0.s8 %v153
    %v155 = vperm.slane %v149, %v154
    %v157 = vunpack.c.l.s4 1934713408
    %v158 = vunpack.c.0.s8 %v157
    %v159 = vperm.slane %v151, %v158
    %v160 = vrot.slane %v147, 4
    %v161 = vsel %vm124, %v160, %v135
    %v162 = vrot.slane %v135, 4
    %v163 = vsel %vm124, %v147, %v162
    %v165 = vunpack.c.l.s4 1934713408
    %v166 = vunpack.c.0.s8 %v165
    %v167 = vperm.slane %v161, %v166
    %v169 = vunpack.c.l.s4 1934713408
    %v170 = vunpack.c.0.s8 %v169
    %v171 = vperm.slane %v163, %v170
    %v172 = vrot.slane %v155, 4
    %v173 = vsel %vm124, 0.0, %v172
    %v174 = vrot.slane %v159, 4
    %v175 = vsel %vm124, 0.0, %v174
    %v176 = vrot.slane %v167, 4
    %v177 = vsel %vm124, 0.0, %v176
    %v178 = vrot.slane %v171, 4
    %v179 = vsel %vm124, 0.0, %v178
    %v180 = vrot.slane %v114, 4
    %v181 = vsel %vm124, %v180, %v102
    %v182 = vrot.slane %v102, 4
    %v183 = vsel %vm124, %v114, %v182
    %v185 = vunpack.c.l.s4 1983009808
    %v186 = vunpack.c.0.s8 %v185
    %v187 = vperm.slane %v181, %v186
    %v189 = vunpack.c.l.s4 1983009808
    %v190 = vunpack.c.0.s8 %v189
    %v191 = vperm.slane %v183, %v190
    %v192 = vrot.slane %v120, 4
    %v193 = vsel %vm124, %v192, %v108
    %v194 = vrot.slane %v108, 4
    %v195 = vsel %vm124, %v120, %v194
    %v197 = vunpack.c.l.s4 1983009808
    %v198 = vunpack.c.0.s8 %v197
    %v199 = vperm.slane %v193, %v198
    %v201 = vunpack.c.l.s4 1983009808
    %v202 = vunpack.c.0.s8 %v201
    %v203 = vperm.slane %v195, %v202
    %v204 = vrot.slane %v199, 4
    %v205 = vsel %vm124, %v204, %v187
    %v206 = vrot.slane %v187, 4
    %v207 = vsel %vm124, %v199, %v206
    %v209 = vunpack.c.l.s4 1934713408
    %v210 = vunpack.c.0.s8 %v209
    %v211 = vperm.slane %v205, %v210
    %v213 = vunpack.c.l.s4 1934713408
    %v214 = vunpack.c.0.s8 %v213
    %v215 = vperm.slane %v207, %v214
    %v216 = vrot.slane %v203, 4
    %v217 = vsel %vm124, %v216, %v191
    %v218 = vrot.slane %v191, 4
    %v219 = vsel %vm124, %v203, %v218
    %v221 = vunpack.c.l.s4 1934713408
    %v222 = vunpack.c.0.s8 %v221
    %v223 = vperm.slane %v217, %v222
    %v225 = vunpack.c.l.s4 1934713408
    %v226 = vunpack.c.0.s8 %v225
    %v227 = vperm.slane %v219, %v226
    %v228 = vrot.slane %v211, 4
    %v229 = vsel %vm124, 0.0, %v228
    %v230 = vrot.slane %v215, 4
    %v231 = vsel %vm124, 0.0, %v230
    %v232 = vrot.slane %v223, 4
    %v233 = vsel %vm124, 0.0, %v232
    %v234 = vrot.slane %v227, 4
    %v235 = vsel %vm124, 0.0, %v234
    %v236 = vsel %vm124, %v176, %v155
    %v238 = vunpack.c.l.s4 1983009808
    %v239 = vunpack.c.0.s8 %v238
    %v240 = vperm.slane %v236, %v239
    %v241 = vsel %vm124, %v178, %v159
    %v243 = vunpack.c.l.s4 1983009808
    %v244 = vunpack.c.0.s8 %v243
    %v245 = vperm.slane %v241, %v244
    %v246 = vsel %vm124, %v232, %v211
    %v248 = vunpack.c.l.s4 1983009808
    %v249 = vunpack.c.0.s8 %v248
    %v250 = vperm.slane %v246, %v249
    %v251 = vsel %vm124, %v234, %v215
    %v253 = vunpack.c.l.s4 1983009808
    %v254 = vunpack.c.0.s8 %v253
    %v255 = vperm.slane %v251, %v254
    %v256 = vrot.slane %v245, 4
    %v257 = vsel %vm124, %v256, %v240
    %v258 = vrot.slane %v240, 4
    %v259 = vsel %vm124, %v245, %v258
    %v261 = vunpack.c.l.s4 1934713408
    %v262 = vunpack.c.0.s8 %v261
    %v263 = vperm.slane %v257, %v262
    %v265 = vunpack.c.l.s4 1934713408
    %v266 = vunpack.c.0.s8 %v265
    %v267 = vperm.slane %v259, %v266
    %v268 = vrot.slane %v255, 4
    %v269 = vsel %vm124, %v268, %v250
    %v270 = vrot.slane %v250, 4
    %v271 = vsel %vm124, %v255, %v270
    %v273 = vunpack.c.l.s4 1934713408
    %v274 = vunpack.c.0.s8 %v273
    %v275 = vperm.slane %v269, %v274
    %v277 = vunpack.c.l.s4 1934713408
    %v278 = vunpack.c.0.s8 %v277
    %v279 = vperm.slane %v271, %v278
    %v280 = vrot.slane %v275, 4
    %v281 = vsel %vm124, %v280, %v263
    %v282 = vrot.slane %v263, 4
    %v283 = vsel %vm124, %v275, %v282
    %v284 = vrot.slane %v279, 4
    %v285 = vsel %vm124, %v284, %v267
    %v286 = vrot.slane %v267, 4
    %v287 = vsel %vm124, %v279, %v286
    %v288 = vrot.slane %v177, 4
    %v289 = vsel %vm124, %v288, %v173
    %v291 = vunpack.c.l.s4 1983009808
    %v292 = vunpack.c.0.s8 %v291
    %v293 = vperm.slane %v289, %v292
    %v294 = vrot.slane %v179, 4
    %v295 = vsel %vm124, %v294, %v175
    %v297 = vunpack.c.l.s4 1983009808
    %v298 = vunpack.c.0.s8 %v297
    %v299 = vperm.slane %v295, %v298
    %v300 = vrot.slane %v233, 4
    %v301 = vsel %vm124, %v300, %v229
    %v303 = vunpack.c.l.s4 1983009808
    %v304 = vunpack.c.0.s8 %v303
    %v305 = vperm.slane %v301, %v304
    %v306 = vrot.slane %v235, 4
    %v307 = vsel %vm124, %v306, %v231
    %v309 = vunpack.c.l.s4 1983009808
    %v310 = vunpack.c.0.s8 %v309
    %v311 = vperm.slane %v307, %v310
    %v312 = vrot.slane %v299, 4
    %v313 = vsel %vm124, %v312, %v293
    %v314 = vrot.slane %v293, 4
    %v315 = vsel %vm124, %v299, %v314
    %v317 = vunpack.c.l.s4 1934713408
    %v318 = vunpack.c.0.s8 %v317
    %v319 = vperm.slane %v313, %v318
    %v321 = vunpack.c.l.s4 1934713408
    %v322 = vunpack.c.0.s8 %v321
    %v323 = vperm.slane %v315, %v322
    %v324 = vrot.slane %v311, 4
    %v325 = vsel %vm124, %v324, %v305
    %v326 = vrot.slane %v305, 4
    %v327 = vsel %vm124, %v311, %v326
    %v329 = vunpack.c.l.s4 1934713408
    %v330 = vunpack.c.0.s8 %v329
    %v331 = vperm.slane %v325, %v330
    %v333 = vunpack.c.l.s4 1934713408
    %v334 = vunpack.c.0.s8 %v333
    %v335 = vperm.slane %v327, %v334
    %v336 = vrot.slane %v331, 4
    %v337 = vsel %vm124, %v336, %v319
    %v338 = vrot.slane %v319, 4
    %v339 = vsel %vm124, %v331, %v338
    %v340 = vrot.slane %v335, 4
    %v341 = vsel %vm124, %v340, %v323
    %v342 = vrot.slane %v323, 4
    %v343 = vsel %vm124, %v335, %v342
    %346 = vrot.lane.b32.xlu0 %v96, 120
    %v347 = vpop.permute.xlu0 %346
    %348 = vrot.lane.b32.xlu0 %v99, 120
    %v349 = vpop.permute.xlu0 %348
    %350 = vrot.lane.b32.xlu0 %v96, 112
    %v351 = vpop.permute.xlu0 %350
    %352 = vrot.lane.b32.xlu0 %v99, 112
    %v353 = vpop.permute.xlu0 %352
    %354 = vrot.lane.b32.xlu0 %v96, 104
    %v355 = vpop.permute.xlu0 %354
    %356 = vrot.lane.b32.xlu0 %v99, 104
    %v357 = vpop.permute.xlu0 %356
    %358 = vrot.lane.b32.xlu0 %v96, 96
    %v359 = vpop.permute.xlu0 %358
    %360 = vrot.lane.b32.xlu0 %v99, 96
    %v361 = vpop.permute.xlu0 %360
    %362 = vrot.lane.b32.xlu0 %v347, 96
    %v363 = vpop.permute.xlu0 %362
    %364 = vrot.lane.b32.xlu0 %v349, 96
    %v365 = vpop.permute.xlu0 %364
    %366 = vrot.lane.b32.xlu0 %v351, 96
    %v367 = vpop.permute.xlu0 %366
    %368 = vrot.lane.b32.xlu0 %v353, 96
    %v369 = vpop.permute.xlu0 %368
    %370 = vrot.lane.b32.xlu0 %v355, 96
    %v371 = vpop.permute.xlu0 %370
    %372 = vrot.lane.b32.xlu0 %v357, 96
    %v373 = vpop.permute.xlu0 %372
    %v382 = vrot.slane %v367, 4
    %v383 = vsel %vm124, %v382, %v359
    %v384 = vrot.slane %v359, 4
    %v385 = vsel %vm124, %v367, %v384
    %v387 = vunpack.c.l.s4 1983009808
    %v388 = vunpack.c.0.s8 %v387
    %v389 = vperm.slane %v383, %v388
    %v391 = vunpack.c.l.s4 1983009808
    %v392 = vunpack.c.0.s8 %v391
    %v393 = vperm.slane %v385, %v392
    %v394 = vrot.slane %v371, 4
    %v395 = vsel %vm124, %v394, %v363
    %v396 = vrot.slane %v363, 4
    %v397 = vsel %vm124, %v371, %v396
    %v399 = vunpack.c.l.s4 1983009808
    %v400 = vunpack.c.0.s8 %v399
    %v401 = vperm.slane %v395, %v400
    %v403 = vunpack.c.l.s4 1983009808
    %v404 = vunpack.c.0.s8 %v403
    %v405 = vperm.slane %v397, %v404
    %v406 = vrot.slane %v401, 4
    %v407 = vsel %vm124, %v406, %v389
    %v408 = vrot.slane %v389, 4
    %v409 = vsel %vm124, %v401, %v408
    %v411 = vunpack.c.l.s4 1934713408
    %v412 = vunpack.c.0.s8 %v411
    %v413 = vperm.slane %v407, %v412
    %v415 = vunpack.c.l.s4 1934713408
    %v416 = vunpack.c.0.s8 %v415
    %v417 = vperm.slane %v409, %v416
    %v418 = vrot.slane %v405, 4
    %v419 = vsel %vm124, %v418, %v393
    %v420 = vrot.slane %v393, 4
    %v421 = vsel %vm124, %v405, %v420
    %v423 = vunpack.c.l.s4 1934713408
    %v424 = vunpack.c.0.s8 %v423
    %v425 = vperm.slane %v419, %v424
    %v427 = vunpack.c.l.s4 1934713408
    %v428 = vunpack.c.0.s8 %v427
    %v429 = vperm.slane %v421, %v428
    %v430 = vrot.slane %v413, 4
    %v431 = vsel %vm124, 0.0, %v430
    %v432 = vrot.slane %v417, 4
    %v433 = vsel %vm124, 0.0, %v432
    %v434 = vrot.slane %v425, 4
    %v435 = vsel %vm124, 0.0, %v434
    %v436 = vrot.slane %v429, 4
    %v437 = vsel %vm124, 0.0, %v436
    %v438 = vrot.slane %v369, 4
    %v439 = vsel %vm124, %v438, %v361
    %v440 = vrot.slane %v361, 4
    %v441 = vsel %vm124, %v369, %v440
    %v443 = vunpack.c.l.s4 1983009808
    %v444 = vunpack.c.0.s8 %v443
    %v445 = vperm.slane %v439, %v444
    %v447 = vunpack.c.l.s4 1983009808
    %v448 = vunpack.c.0.s8 %v447
    %v449 = vperm.slane %v441, %v448
    %v450 = vrot.slane %v373, 4
    %v451 = vsel %vm124, %v450, %v365
    %v452 = vrot.slane %v365, 4
    %v453 = vsel %vm124, %v373, %v452
    %v455 = vunpack.c.l.s4 1983009808
    %v456 = vunpack.c.0.s8 %v455
    %v457 = vperm.slane %v451, %v456
    %v459 = vunpack.c.l.s4 1983009808
    %v460 = vunpack.c.0.s8 %v459
    %v461 = vperm.slane %v453, %v460
    %v462 = vrot.slane %v457, 4
    %v463 = vsel %vm124, %v462, %v445
    %v464 = vrot.slane %v445, 4
    %v465 = vsel %vm124, %v457, %v464
    %v467 = vunpack.c.l.s4 1934713408
    %v468 = vunpack.c.0.s8 %v467
    %v469 = vperm.slane %v463, %v468
    %v471 = vunpack.c.l.s4 1934713408
    %v472 = vunpack.c.0.s8 %v471
    %v473 = vperm.slane %v465, %v472
    %v474 = vrot.slane %v461, 4
    %v475 = vsel %vm124, %v474, %v449
    %v476 = vrot.slane %v449, 4
    %v477 = vsel %vm124, %v461, %v476
    %v479 = vunpack.c.l.s4 1934713408
    %v480 = vunpack.c.0.s8 %v479
    %v481 = vperm.slane %v475, %v480
    %v483 = vunpack.c.l.s4 1934713408
    %v484 = vunpack.c.0.s8 %v483
    %v485 = vperm.slane %v477, %v484
    %v486 = vrot.slane %v469, 4
    %v487 = vsel %vm124, 0.0, %v486
    %v488 = vrot.slane %v473, 4
    %v489 = vsel %vm124, 0.0, %v488
    %v490 = vrot.slane %v481, 4
    %v491 = vsel %vm124, 0.0, %v490
    %v492 = vrot.slane %v485, 4
    %v493 = vsel %vm124, 0.0, %v492
    %v494 = vsel %vm124, %v434, %v413
    %v496 = vunpack.c.l.s4 1983009808
    %v497 = vunpack.c.0.s8 %v496
    %v498 = vperm.slane %v494, %v497
    %v499 = vsel %vm124, %v436, %v417
    %v501 = vunpack.c.l.s4 1983009808
    %v502 = vunpack.c.0.s8 %v501
    %v503 = vperm.slane %v499, %v502
    %v504 = vsel %vm124, %v490, %v469
    %v506 = vunpack.c.l.s4 1983009808
    %v507 = vunpack.c.0.s8 %v506
    %v508 = vperm.slane %v504, %v507
    %v509 = vsel %vm124, %v492, %v473
    %v511 = vunpack.c.l.s4 1983009808
    %v512 = vunpack.c.0.s8 %v511
    %v513 = vperm.slane %v509, %v512
    %v514 = vrot.slane %v503, 4
    %v515 = vsel %vm124, %v514, %v498
    %v516 = vrot.slane %v498, 4
    %v517 = vsel %vm124, %v503, %v516
    %v519 = vunpack.c.l.s4 1934713408
    %v520 = vunpack.c.0.s8 %v519
    %v521 = vperm.slane %v515, %v520
    %v523 = vunpack.c.l.s4 1934713408
    %v524 = vunpack.c.0.s8 %v523
    %v525 = vperm.slane %v517, %v524
    %v526 = vrot.slane %v513, 4
    %v527 = vsel %vm124, %v526, %v508
    %v528 = vrot.slane %v508, 4
    %v529 = vsel %vm124, %v513, %v528
    %v531 = vunpack.c.l.s4 1934713408
    %v532 = vunpack.c.0.s8 %v531
    %v533 = vperm.slane %v527, %v532
    %v535 = vunpack.c.l.s4 1934713408
    %v536 = vunpack.c.0.s8 %v535
    %v537 = vperm.slane %v529, %v536
    %v538 = vrot.slane %v533, 4
    %v539 = vsel %vm124, %v538, %v521
    %v540 = vrot.slane %v521, 4
    %v541 = vsel %vm124, %v533, %v540
    %v542 = vrot.slane %v537, 4
    %v543 = vsel %vm124, %v542, %v525
    %v544 = vrot.slane %v525, 4
    %v545 = vsel %vm124, %v537, %v544
    %v546 = vrot.slane %v435, 4
    %v547 = vsel %vm124, %v546, %v431
    %v549 = vunpack.c.l.s4 1983009808
    %v550 = vunpack.c.0.s8 %v549
    %v551 = vperm.slane %v547, %v550
    %v552 = vrot.slane %v437, 4
    %v553 = vsel %vm124, %v552, %v433
    %v555 = vunpack.c.l.s4 1983009808
    %v556 = vunpack.c.0.s8 %v555
    %v557 = vperm.slane %v553, %v556
    %v558 = vrot.slane %v491, 4
    %v559 = vsel %vm124, %v558, %v487
    %v561 = vunpack.c.l.s4 1983009808
    %v562 = vunpack.c.0.s8 %v561
    %v563 = vperm.slane %v559, %v562
    %v564 = vrot.slane %v493, 4
    %v565 = vsel %vm124, %v564, %v489
    %v567 = vunpack.c.l.s4 1983009808
    %v568 = vunpack.c.0.s8 %v567
    %v569 = vperm.slane %v565, %v568
    %v570 = vrot.slane %v557, 4
    %v571 = vsel %vm124, %v570, %v551
    %v572 = vrot.slane %v551, 4
    %v573 = vsel %vm124, %v557, %v572
    %v575 = vunpack.c.l.s4 1934713408
    %v576 = vunpack.c.0.s8 %v575
    %v577 = vperm.slane %v571, %v576
    %v579 = vunpack.c.l.s4 1934713408
    %v580 = vunpack.c.0.s8 %v579
    %v581 = vperm.slane %v573, %v580
    %v582 = vrot.slane %v569, 4
    %v583 = vsel %vm124, %v582, %v563
    %v584 = vrot.slane %v563, 4
    %v585 = vsel %vm124, %v569, %v584
    %v587 = vunpack.c.l.s4 1934713408
    %v588 = vunpack.c.0.s8 %v587
    %v589 = vperm.slane %v583, %v588
    %v591 = vunpack.c.l.s4 1934713408
    %v592 = vunpack.c.0.s8 %v591
    %v593 = vperm.slane %v585, %v592
    %v594 = vrot.slane %v589, 4
    %v595 = vsel %vm124, %v594, %v577
    %v596 = vrot.slane %v577, 4
    %v597 = vsel %vm124, %v589, %v596
    %v598 = vrot.slane %v593, 4
    %v599 = vsel %vm124, %v598, %v581
    %v600 = vrot.slane %v581, 4
    %v601 = vsel %vm124, %v593, %v600
    %602 = vrot.lane.b32.xlu0 %v96, 64
    %v603 = vpop.permute.xlu0 %602
    %604 = vrot.lane.b32.xlu0 %v99, 64
    %v605 = vpop.permute.xlu0 %604
    %606 = vrot.lane.b32.xlu0 %v347, 64
    %v607 = vpop.permute.xlu0 %606
    %608 = vrot.lane.b32.xlu0 %v349, 64
    %v609 = vpop.permute.xlu0 %608
    %610 = vrot.lane.b32.xlu0 %v351, 64
    %v611 = vpop.permute.xlu0 %610
    %612 = vrot.lane.b32.xlu0 %v353, 64
    %v613 = vpop.permute.xlu0 %612
    %614 = vrot.lane.b32.xlu0 %v355, 64
    %v615 = vpop.permute.xlu0 %614
    %616 = vrot.lane.b32.xlu0 %v357, 64
    %v617 = vpop.permute.xlu0 %616
    %v626 = vrot.slane %v611, 4
    %v627 = vsel %vm124, %v626, %v603
    %v628 = vrot.slane %v603, 4
    %v629 = vsel %vm124, %v611, %v628
    %v631 = vunpack.c.l.s4 1983009808
    %v632 = vunpack.c.0.s8 %v631
    %v633 = vperm.slane %v627, %v632
    %v635 = vunpack.c.l.s4 1983009808
    %v636 = vunpack.c.0.s8 %v635
    %v637 = vperm.slane %v629, %v636
    %v638 = vrot.slane %v615, 4
    %v639 = vsel %vm124, %v638, %v607
    %v640 = vrot.slane %v607, 4
    %v641 = vsel %vm124, %v615, %v640
    %v643 = vunpack.c.l.s4 1983009808
    %v644 = vunpack.c.0.s8 %v643
    %v645 = vperm.slane %v639, %v644
    %v647 = vunpack.c.l.s4 1983009808
    %v648 = vunpack.c.0.s8 %v647
    %v649 = vperm.slane %v641, %v648
    %v650 = vrot.slane %v645, 4
    %v651 = vsel %vm124, %v650, %v633
    %v652 = vrot.slane %v633, 4
    %v653 = vsel %vm124, %v645, %v652
    %v655 = vunpack.c.l.s4 1934713408
    %v656 = vunpack.c.0.s8 %v655
    %v657 = vperm.slane %v651, %v656
    %v659 = vunpack.c.l.s4 1934713408
    %v660 = vunpack.c.0.s8 %v659
    %v661 = vperm.slane %v653, %v660
    %v662 = vrot.slane %v649, 4
    %v663 = vsel %vm124, %v662, %v637
    %v664 = vrot.slane %v637, 4
    %v665 = vsel %vm124, %v649, %v664
    %v667 = vunpack.c.l.s4 1934713408
    %v668 = vunpack.c.0.s8 %v667
    %v669 = vperm.slane %v663, %v668
    %v671 = vunpack.c.l.s4 1934713408
    %v672 = vunpack.c.0.s8 %v671
    %v673 = vperm.slane %v665, %v672
    %v674 = vrot.slane %v657, 4
    %v675 = vsel %vm124, 0.0, %v674
    %v676 = vrot.slane %v661, 4
    %v677 = vsel %vm124, 0.0, %v676
    %v678 = vrot.slane %v669, 4
    %v679 = vsel %vm124, 0.0, %v678
    %v680 = vrot.slane %v673, 4
    %v681 = vsel %vm124, 0.0, %v680
    %v682 = vrot.slane %v613, 4
    %v683 = vsel %vm124, %v682, %v605
    %v684 = vrot.slane %v605, 4
    %v685 = vsel %vm124, %v613, %v684
    %v687 = vunpack.c.l.s4 1983009808
    %v688 = vunpack.c.0.s8 %v687
    %v689 = vperm.slane %v683, %v688
    %v691 = vunpack.c.l.s4 1983009808
    %v692 = vunpack.c.0.s8 %v691
    %v693 = vperm.slane %v685, %v692
    %v694 = vrot.slane %v617, 4
    %v695 = vsel %vm124, %v694, %v609
    %v696 = vrot.slane %v609, 4
    %v697 = vsel %vm124, %v617, %v696
    %v699 = vunpack.c.l.s4 1983009808
    %v700 = vunpack.c.0.s8 %v699
    %v701 = vperm.slane %v695, %v700
    %v703 = vunpack.c.l.s4 1983009808
    %v704 = vunpack.c.0.s8 %v703
    %v705 = vperm.slane %v697, %v704
    %v706 = vrot.slane %v701, 4
    %v707 = vsel %vm124, %v706, %v689
    %v708 = vrot.slane %v689, 4
    %v709 = vsel %vm124, %v701, %v708
    %v711 = vunpack.c.l.s4 1934713408
    %v712 = vunpack.c.0.s8 %v711
    %v713 = vperm.slane %v707, %v712
    %v715 = vunpack.c.l.s4 1934713408
    %v716 = vunpack.c.0.s8 %v715
    %v717 = vperm.slane %v709, %v716
    %v718 = vrot.slane %v705, 4
    %v719 = vsel %vm124, %v718, %v693
    %v720 = vrot.slane %v693, 4
    %v721 = vsel %vm124, %v705, %v720
    %v723 = vunpack.c.l.s4 1934713408
    %v724 = vunpack.c.0.s8 %v723
    %v725 = vperm.slane %v719, %v724
    %v727 = vunpack.c.l.s4 1934713408
    %v728 = vunpack.c.0.s8 %v727
    %v729 = vperm.slane %v721, %v728
    %v730 = vrot.slane %v713, 4
    %v731 = vsel %vm124, 0.0, %v730
    %v732 = vrot.slane %v717, 4
    %v733 = vsel %vm124, 0.0, %v732
    %v734 = vrot.slane %v725, 4
    %v735 = vsel %vm124, 0.0, %v734
    %v736 = vrot.slane %v729, 4
    %v737 = vsel %vm124, 0.0, %v736
    %v738 = vsel %vm124, %v678, %v657
    %v740 = vunpack.c.l.s4 1983009808
    %v741 = vunpack.c.0.s8 %v740
    %v742 = vperm.slane %v738, %v741
    %v743 = vsel %vm124, %v680, %v661
    %v745 = vunpack.c.l.s4 1983009808
    %v746 = vunpack.c.0.s8 %v745
    %v747 = vperm.slane %v743, %v746
    %v748 = vsel %vm124, %v734, %v713
    %v750 = vunpack.c.l.s4 1983009808
    %v751 = vunpack.c.0.s8 %v750
    %v752 = vperm.slane %v748, %v751
    %v753 = vsel %vm124, %v736, %v717
    %v755 = vunpack.c.l.s4 1983009808
    %v756 = vunpack.c.0.s8 %v755
    %v757 = vperm.slane %v753, %v756
    %v758 = vrot.slane %v747, 4
    %v759 = vsel %vm124, %v758, %v742
    %v760 = vrot.slane %v742, 4
    %v761 = vsel %vm124, %v747, %v760
    %v763 = vunpack.c.l.s4 1934713408
    %v764 = vunpack.c.0.s8 %v763
    %v765 = vperm.slane %v759, %v764
    %v767 = vunpack.c.l.s4 1934713408
    %v768 = vunpack.c.0.s8 %v767
    %v769 = vperm.slane %v761, %v768
    %v770 = vrot.slane %v757, 4
    %v771 = vsel %vm124, %v770, %v752
    %v772 = vrot.slane %v752, 4
    %v773 = vsel %vm124, %v757, %v772
    %v775 = vunpack.c.l.s4 1934713408
    %v776 = vunpack.c.0.s8 %v775
    %v777 = vperm.slane %v771, %v776
    %v779 = vunpack.c.l.s4 1934713408
    %v780 = vunpack.c.0.s8 %v779
    %v781 = vperm.slane %v773, %v780
    %v782 = vrot.slane %v777, 4
    %v783 = vsel %vm124, %v782, %v765
    %v784 = vrot.slane %v765, 4
    %v785 = vsel %vm124, %v777, %v784
    %v786 = vrot.slane %v781, 4
    %v787 = vsel %vm124, %v786, %v769
    %v788 = vrot.slane %v769, 4
    %v789 = vsel %vm124, %v781, %v788
    %v790 = vrot.slane %v679, 4
    %v791 = vsel %vm124, %v790, %v675
    %v793 = vunpack.c.l.s4 1983009808
    %v794 = vunpack.c.0.s8 %v793
    %v795 = vperm.slane %v791, %v794
    %v796 = vrot.slane %v681, 4
    %v797 = vsel %vm124, %v796, %v677
    %v799 = vunpack.c.l.s4 1983009808
    %v800 = vunpack.c.0.s8 %v799
    %v801 = vperm.slane %v797, %v800
    %v802 = vrot.slane %v735, 4
    %v803 = vsel %vm124, %v802, %v731
    %v805 = vunpack.c.l.s4 1983009808
    %v806 = vunpack.c.0.s8 %v805
    %v807 = vperm.slane %v803, %v806
    %v808 = vrot.slane %v737, 4
    %v809 = vsel %vm124, %v808, %v733
    %v811 = vunpack.c.l.s4 1983009808
    %v812 = vunpack.c.0.s8 %v811
    %v813 = vperm.slane %v809, %v812
    %v814 = vrot.slane %v801, 4
    %v815 = vsel %vm124, %v814, %v795
    %v816 = vrot.slane %v795, 4
    %v817 = vsel %vm124, %v801, %v816
    %v819 = vunpack.c.l.s4 1934713408
    %v820 = vunpack.c.0.s8 %v819
    %v821 = vperm.slane %v815, %v820
    %v823 = vunpack.c.l.s4 1934713408
    %v824 = vunpack.c.0.s8 %v823
    %v825 = vperm.slane %v817, %v824
    %v826 = vrot.slane %v813, 4
    %v827 = vsel %vm124, %v826, %v807
    %v828 = vrot.slane %v807, 4
    %v829 = vsel %vm124, %v813, %v828
    %v831 = vunpack.c.l.s4 1934713408
    %v832 = vunpack.c.0.s8 %v831
    %v833 = vperm.slane %v827, %v832
    %v835 = vunpack.c.l.s4 1934713408
    %v836 = vunpack.c.0.s8 %v835
    %v837 = vperm.slane %v829, %v836
    %v838 = vrot.slane %v833, 4
    %v839 = vsel %vm124, %v838, %v821
    %v840 = vrot.slane %v821, 4
    %v841 = vsel %vm124, %v833, %v840
    %v842 = vrot.slane %v837, 4
    %v843 = vsel %vm124, %v842, %v825
    %v844 = vrot.slane %v825, 4
    %v845 = vsel %vm124, %v837, %v844
    %vm846 = vcmask 64512
    %v848 = vsel %vm846, %v281, 0
    %v851 = vsel %vm846, %v539, 0
    %853 = vmatpush.xpose.msra.mxu0 0.0
    %854 = vmatpush.xpose.msra.mxu0 0.0
    %855 = vmatpush.xpose.msra.mxu0 0.0
    %856 = vmatpush.xpose.msra.mxu0 0.0
    %857 = vmatpush.xpose.msra.mxu0 0.0
    %858 = vmatpush.xpose.msra.mxu0 0.0
    %859 = vmatpush.xpose.msra.mxu0 0.0
    %860 = vmatpush.xpose.msra.mxu0 0.0
    %861 = vmatpush.xpose.msra.mxu0 0.0
    %862 = vmatpush.xpose.msra.mxu0 0.0
    %863 = vmatpush.xpose.msra.mxu0 0.0
    %864 = vmatpush.xpose.msra.mxu0 0.0
    %865 = vmatpush.xpose.msra.mxu0 0.0
    %866 = vmatpush.xpose.msra.mxu0 0.0
    %867 = vmatpush.xpose.msra.mxu0 0.0
    %868 = vmatpush.xpose.msra.mxu0 %v851
    %869 = vmatmul.f32.gmra.mxu0 %v848
    %v870 = vpop.f32.mrf.mxu0
    %v871 = vadd.f32 0.0, %v870
    %872 = vdwg.mxu0
    %v874 = vsel %vm846, %v283, 0
    %v877 = vsel %vm846, %v541, 0
    %879 = vmatpush.xpose.msra.mxu0 0.0
    %880 = vmatpush.xpose.msra.mxu0 0.0
    %881 = vmatpush.xpose.msra.mxu0 0.0
    %882 = vmatpush.xpose.msra.mxu0 0.0
    %883 = vmatpush.xpose.msra.mxu0 0.0
    %884 = vmatpush.xpose.msra.mxu0 0.0
    %885 = vmatpush.xpose.msra.mxu0 0.0
    %886 = vmatpush.xpose.msra.mxu0 0.0
    %887 = vmatpush.xpose.msra.mxu0 0.0
    %888 = vmatpush.xpose.msra.mxu0 0.0
    %889 = vmatpush.xpose.msra.mxu0 0.0
    %890 = vmatpush.xpose.msra.mxu0 0.0
    %891 = vmatpush.xpose.msra.mxu0 0.0
    %892 = vmatpush.xpose.msra.mxu0 0.0
    %893 = vmatpush.xpose.msra.mxu0 0.0
    %894 = vmatpush.xpose.msra.mxu0 %v877
    %895 = vmatmul.f32.gmra.mxu0 %v874
    %v896 = vpop.f32.mrf.mxu0
    %v897 = vadd.f32 0.0, %v896
    %898 = vdwg.mxu0
    %v900 = vsel %vm846, %v285, 0
    %v903 = vsel %vm846, %v543, 0
    %905 = vmatpush.xpose.msra.mxu0 0.0
    %906 = vmatpush.xpose.msra.mxu0 0.0
    %907 = vmatpush.xpose.msra.mxu0 0.0
    %908 = vmatpush.xpose.msra.mxu0 0.0
    %909 = vmatpush.xpose.msra.mxu0 0.0
    %910 = vmatpush.xpose.msra.mxu0 0.0
    %911 = vmatpush.xpose.msra.mxu0 0.0
    %912 = vmatpush.xpose.msra.mxu0 0.0
    %913 = vmatpush.xpose.msra.mxu0 0.0
    %914 = vmatpush.xpose.msra.mxu0 0.0
    %915 = vmatpush.xpose.msra.mxu0 0.0
    %916 = vmatpush.xpose.msra.mxu0 0.0
    %917 = vmatpush.xpose.msra.mxu0 0.0
    %918 = vmatpush.xpose.msra.mxu0 0.0
    %919 = vmatpush.xpose.msra.mxu0 0.0
    %920 = vmatpush.xpose.msra.mxu0 %v903
    %921 = vmatmul.f32.gmra.mxu0 %v900
    %v922 = vpop.f32.mrf.mxu0
    %v923 = vadd.f32 0.0, %v922
    %924 = vdwg.mxu0
    %v926 = vsel %vm846, %v287, 0
    %v929 = vsel %vm846, %v545, 0
    %931 = vmatpush.xpose.msra.mxu0 0.0
    %932 = vmatpush.xpose.msra.mxu0 0.0
    %933 = vmatpush.xpose.msra.mxu0 0.0
    %934 = vmatpush.xpose.msra.mxu0 0.0
    %935 = vmatpush.xpose.msra.mxu0 0.0
    %936 = vmatpush.xpose.msra.mxu0 0.0
    %937 = vmatpush.xpose.msra.mxu0 0.0
    %938 = vmatpush.xpose.msra.mxu0 0.0
    %939 = vmatpush.xpose.msra.mxu0 0.0
    %940 = vmatpush.xpose.msra.mxu0 0.0
    %941 = vmatpush.xpose.msra.mxu0 0.0
    %942 = vmatpush.xpose.msra.mxu0 0.0
    %943 = vmatpush.xpose.msra.mxu0 0.0
    %944 = vmatpush.xpose.msra.mxu0 0.0
    %945 = vmatpush.xpose.msra.mxu0 0.0
    %946 = vmatpush.xpose.msra.mxu0 %v929
    %947 = vmatmul.f32.gmra.mxu0 %v926
    %v948 = vpop.f32.mrf.mxu0
    %v949 = vadd.f32 0.0, %v948
    %950 = vdwg.mxu0
    %v952 = vsel %vm846, %v337, 0
    %v955 = vsel %vm846, %v595, 0
    %957 = vmatpush.xpose.msra.mxu0 0.0
    %958 = vmatpush.xpose.msra.mxu0 0.0
    %959 = vmatpush.xpose.msra.mxu0 0.0
    %960 = vmatpush.xpose.msra.mxu0 0.0
    %961 = vmatpush.xpose.msra.mxu0 0.0
    %962 = vmatpush.xpose.msra.mxu0 0.0
    %963 = vmatpush.xpose.msra.mxu0 0.0
    %964 = vmatpush.xpose.msra.mxu0 0.0
    %965 = vmatpush.xpose.msra.mxu0 0.0
    %966 = vmatpush.xpose.msra.mxu0 0.0
    %967 = vmatpush.xpose.msra.mxu0 0.0
    %968 = vmatpush.xpose.msra.mxu0 0.0
    %969 = vmatpush.xpose.msra.mxu0 0.0
    %970 = vmatpush.xpose.msra.mxu0 0.0
    %971 = vmatpush.xpose.msra.mxu0 0.0
    %972 = vmatpush.xpose.msra.mxu0 %v955
    %973 = vmatmul.f32.gmra.mxu0 %v952
    %v974 = vpop.f32.mrf.mxu0
    %v975 = vadd.f32 0.0, %v974
    %976 = vdwg.mxu0
    %v978 = vsel %vm846, %v339, 0
    %v981 = vsel %vm846, %v597, 0
    %983 = vmatpush.xpose.msra.mxu0 0.0
    %984 = vmatpush.xpose.msra.mxu0 0.0
    %985 = vmatpush.xpose.msra.mxu0 0.0
    %986 = vmatpush.xpose.msra.mxu0 0.0
    %987 = vmatpush.xpose.msra.mxu0 0.0
    %988 = vmatpush.xpose.msra.mxu0 0.0
    %989 = vmatpush.xpose.msra.mxu0 0.0
    %990 = vmatpush.xpose.msra.mxu0 0.0
    %991 = vmatpush.xpose.msra.mxu0 0.0
    %992 = vmatpush.xpose.msra.mxu0 0.0
    %993 = vmatpush.xpose.msra.mxu0 0.0
    %994 = vmatpush.xpose.msra.mxu0 0.0
    %995 = vmatpush.xpose.msra.mxu0 0.0
    %996 = vmatpush.xpose.msra.mxu0 0.0
    %997 = vmatpush.xpose.msra.mxu0 0.0
    %998 = vmatpush.xpose.msra.mxu0 %v981
    %999 = vmatmul.f32.gmra.mxu0 %v978
    %v1000 = vpop.f32.mrf.mxu0
    %v1001 = vadd.f32 0.0, %v1000
    %1002 = vdwg.mxu0
    %v1004 = vsel %vm846, %v341, 0
    %v1007 = vsel %vm846, %v599, 0
    %1009 = vmatpush.xpose.msra.mxu0 0.0
    %1010 = vmatpush.xpose.msra.mxu0 0.0
    %1011 = vmatpush.xpose.msra.mxu0 0.0
    %1012 = vmatpush.xpose.msra.mxu0 0.0
    %1013 = vmatpush.xpose.msra.mxu0 0.0
    %1014 = vmatpush.xpose.msra.mxu0 0.0
    %1015 = vmatpush.xpose.msra.mxu0 0.0
    %1016 = vmatpush.xpose.msra.mxu0 0.0
    %1017 = vmatpush.xpose.msra.mxu0 0.0
    %1018 = vmatpush.xpose.msra.mxu0 0.0
    %1019 = vmatpush.xpose.msra.mxu0 0.0
    %1020 = vmatpush.xpose.msra.mxu0 0.0
    %1021 = vmatpush.xpose.msra.mxu0 0.0
    %1022 = vmatpush.xpose.msra.mxu0 0.0
    %1023 = vmatpush.xpose.msra.mxu0 0.0
    %1024 = vmatpush.xpose.msra.mxu0 %v1007
    %1025 = vmatmul.f32.gmra.mxu0 %v1004
    %v1026 = vpop.f32.mrf.mxu0
    %v1027 = vadd.f32 0.0, %v1026
    %1028 = vdwg.mxu0
    %v1030 = vsel %vm846, %v343, 0
    %v1033 = vsel %vm846, %v601, 0
    %1035 = vmatpush.xpose.msra.mxu0 0.0
    %1036 = vmatpush.xpose.msra.mxu0 0.0
    %1037 = vmatpush.xpose.msra.mxu0 0.0
    %1038 = vmatpush.xpose.msra.mxu0 0.0
    %1039 = vmatpush.xpose.msra.mxu0 0.0
    %1040 = vmatpush.xpose.msra.mxu0 0.0
    %1041 = vmatpush.xpose.msra.mxu0 0.0
    %1042 = vmatpush.xpose.msra.mxu0 0.0
    %1043 = vmatpush.xpose.msra.mxu0 0.0
    %1044 = vmatpush.xpose.msra.mxu0 0.0
    %1045 = vmatpush.xpose.msra.mxu0 0.0
    %1046 = vmatpush.xpose.msra.mxu0 0.0
    %1047 = vmatpush.xpose.msra.mxu0 0.0
    %1048 = vmatpush.xpose.msra.mxu0 0.0
    %1049 = vmatpush.xpose.msra.mxu0 0.0
    %1050 = vmatpush.xpose.msra.mxu0 %v1033
    %1051 = vmatmul.f32.gmra.mxu0 %v1030
    %v1052 = vpop.f32.mrf.mxu0
    %v1053 = vadd.f32 0.0, %v1052
    %1054 = vdwg.mxu0
    %v1055 = vsel %vm846, %v871, -inf
    %1056 = vmax.xlane.f32.xlu0 %v1055
    %v1057 = vpop.xlane.xlu0 %1056
    %v1058 = vsel %vm846, %v897, -inf
    %1059 = vmax.xlane.f32.xlu0 %v1058
    %v1060 = vpop.xlane.xlu0 %1059
    %v1061 = vsel %vm846, %v923, -inf
    %1062 = vmax.xlane.f32.xlu0 %v1061
    %v1063 = vpop.xlane.xlu0 %1062
    %v1064 = vsel %vm846, %v949, -inf
    %1065 = vmax.xlane.f32.xlu0 %v1064
    %v1066 = vpop.xlane.xlu0 %1065
    %v1067 = vsel %vm846, %v975, -inf
    %1068 = vmax.xlane.f32.xlu0 %v1067
    %v1069 = vpop.xlane.xlu0 %1068
    %v1070 = vsel %vm846, %v1001, -inf
    %1071 = vmax.xlane.f32.xlu0 %v1070
    %v1072 = vpop.xlane.xlu0 %1071
    %v1073 = vsel %vm846, %v1027, -inf
    %1074 = vmax.xlane.f32.xlu0 %v1073
    %v1075 = vpop.xlane.xlu0 %1074
    %v1076 = vsel %vm846, %v1053, -inf
    %1077 = vmax.xlane.f32.xlu0 %v1076
    %v1078 = vpop.xlane.xlu0 %1077
    %v1079 = vsub.f32 %v871, %v1057
    %v1080 = vsub.f32 %v897, %v1060
    %v1081 = vsub.f32 %v923, %v1063
    %v1082 = vsub.f32 %v949, %v1066
    %v1083 = vsub.f32 %v975, %v1069
    %v1084 = vsub.f32 %v1001, %v1072
    %v1085 = vsub.f32 %v1027, %v1075
    %v1086 = vsub.f32 %v1053, %v1078
    %v1087 = vmul.f32 %v1079, 1.442695
    %v1088 = vpow.pop %v1087
    %v1089 = vmul.f32 %v1080, 1.442695
    %v1090 = vpow.pop %v1089
    %v1091 = vmul.f32 %v1081, 1.442695
    %v1092 = vpow.pop %v1091
    %v1093 = vmul.f32 %v1082, 1.442695
    %v1094 = vpow.pop %v1093
    %v1095 = vmul.f32 %v1083, 1.442695
    %v1096 = vpow.pop %v1095
    %v1097 = vmul.f32 %v1084, 1.442695
    %v1098 = vpow.pop %v1097
    %v1099 = vmul.f32 %v1085, 1.442695
    %v1100 = vpow.pop %v1099
    %v1101 = vmul.f32 %v1086, 1.442695
    %v1102 = vpow.pop %v1101
    %v1103 = vsel %vm846, %v1088, 0.0
    %1104 = vadd.xlane.f32.xlu0 %v1103
    %v1105 = vpop.xlane.xlu0 %1104
    %v1106 = vsel %vm846, %v1090, 0.0
    %1107 = vadd.xlane.f32.xlu0 %v1106
    %v1108 = vpop.xlane.xlu0 %1107
    %v1109 = vsel %vm846, %v1092, 0.0
    %1110 = vadd.xlane.f32.xlu0 %v1109
    %v1111 = vpop.xlane.xlu0 %1110
    %v1112 = vsel %vm846, %v1094, 0.0
    %1113 = vadd.xlane.f32.xlu0 %v1112
    %v1114 = vpop.xlane.xlu0 %1113
    %v1115 = vsel %vm846, %v1096, 0.0
    %1116 = vadd.xlane.f32.xlu0 %v1115
    %v1117 = vpop.xlane.xlu0 %1116
    %v1118 = vsel %vm846, %v1098, 0.0
    %1119 = vadd.xlane.f32.xlu0 %v1118
    %v1120 = vpop.xlane.xlu0 %1119
    %v1121 = vsel %vm846, %v1100, 0.0
    %1122 = vadd.xlane.f32.xlu0 %v1121
    %v1123 = vpop.xlane.xlu0 %1122
    %v1124 = vsel %vm846, %v1102, 0.0
    %1125 = vadd.xlane.f32.xlu0 %v1124
    %v1126 = vpop.xlane.xlu0 %1125
    %v1127 = vrcp.pop %v1105
    %v1128 = vrcp.pop %v1108
    %v1129 = vrcp.pop %v1111
    %v1130 = vrcp.pop %v1114
    %v1131 = vrcp.pop %v1117
    %v1132 = vrcp.pop %v1120
    %v1133 = vrcp.pop %v1123
    %v1134 = vrcp.pop %v1126
    %v1135 = vmul.f32 %v1088, %v1127
    %v1136 = vmul.f32 %v1090, %v1128
    %v1137 = vmul.f32 %v1092, %v1129
    %v1138 = vmul.f32 %v1094, %v1130
    %v1139 = vmul.f32 %v1096, %v1131
    %v1140 = vmul.f32 %v1098, %v1132
    %v1141 = vmul.f32 %v1100, %v1133
    %v1142 = vmul.f32 %v1102, %v1134
    %v1144 = vsel %vm846, %v1135, 0
    %1146 = vmatpush.msra.mxu0 0.0
    %1147 = vmatpush.msra.mxu0 0.0
    %1148 = vmatpush.msra.mxu0 0.0
    %1149 = vmatpush.msra.mxu0 0.0
    %1150 = vmatpush.msra.mxu0 0.0
    %1151 = vmatpush.msra.mxu0 0.0
    %1152 = vmatpush.msra.mxu0 0.0
    %1153 = vmatpush.msra.mxu0 0.0
    %1154 = vmatpush.msra.mxu0 0.0
    %1155 = vmatpush.msra.mxu0 0.0
    %1156 = vmatpush.msra.mxu0 0.0
    %1157 = vmatpush.msra.mxu0 0.0
    %1158 = vmatpush.msra.mxu0 0.0
    %1159 = vmatpush.msra.mxu0 0.0
    %1160 = vmatpush.msra.mxu0 0.0
    %1161 = vmatpush.msra.mxu0 %v783
    %1162 = vmatmul.f32.gmra.mxu0 %v1144
    %v1163 = vpop.f32.mrf.mxu0
    %v1164 = vadd.f32 0.0, %v1163
    %1165 = vdwg.mxu0
    %v1167 = vsel %vm846, %v1136, 0
    %1169 = vmatpush.msra.mxu0 0.0
    %1170 = vmatpush.msra.mxu0 0.0
    %1171 = vmatpush.msra.mxu0 0.0
    %1172 = vmatpush.msra.mxu0 0.0
    %1173 = vmatpush.msra.mxu0 0.0
    %1174 = vmatpush.msra.mxu0 0.0
    %1175 = vmatpush.msra.mxu0 0.0
    %1176 = vmatpush.msra.mxu0 0.0
    %1177 = vmatpush.msra.mxu0 0.0
    %1178 = vmatpush.msra.mxu0 0.0
    %1179 = vmatpush.msra.mxu0 0.0
    %1180 = vmatpush.msra.mxu0 0.0
    %1181 = vmatpush.msra.mxu0 0.0
    %1182 = vmatpush.msra.mxu0 0.0
    %1183 = vmatpush.msra.mxu0 0.0
    %1184 = vmatpush.msra.mxu0 %v785
    %1185 = vmatmul.f32.gmra.mxu0 %v1167
    %v1186 = vpop.f32.mrf.mxu0
    %v1187 = vadd.f32 0.0, %v1186
    %1188 = vdwg.mxu0
    %v1190 = vsel %vm846, %v1137, 0
    %1192 = vmatpush.msra.mxu0 0.0
    %1193 = vmatpush.msra.mxu0 0.0
    %1194 = vmatpush.msra.mxu0 0.0
    %1195 = vmatpush.msra.mxu0 0.0
    %1196 = vmatpush.msra.mxu0 0.0
    %1197 = vmatpush.msra.mxu0 0.0
    %1198 = vmatpush.msra.mxu0 0.0
    %1199 = vmatpush.msra.mxu0 0.0
    %1200 = vmatpush.msra.mxu0 0.0
    %1201 = vmatpush.msra.mxu0 0.0
    %1202 = vmatpush.msra.mxu0 0.0
    %1203 = vmatpush.msra.mxu0 0.0
    %1204 = vmatpush.msra.mxu0 0.0
    %1205 = vmatpush.msra.mxu0 0.0
    %1206 = vmatpush.msra.mxu0 0.0
    %1207 = vmatpush.msra.mxu0 %v787
    %1208 = vmatmul.f32.gmra.mxu0 %v1190
    %v1209 = vpop.f32.mrf.mxu0
    %v1210 = vadd.f32 0.0, %v1209
    %1211 = vdwg.mxu0
    %v1213 = vsel %vm846, %v1138, 0
    %1215 = vmatpush.msra.mxu0 0.0
    %1216 = vmatpush.msra.mxu0 0.0
    %1217 = vmatpush.msra.mxu0 0.0
    %1218 = vmatpush.msra.mxu0 0.0
    %1219 = vmatpush.msra.mxu0 0.0
    %1220 = vmatpush.msra.mxu0 0.0
    %1221 = vmatpush.msra.mxu0 0.0
    %1222 = vmatpush.msra.mxu0 0.0
    %1223 = vmatpush.msra.mxu0 0.0
    %1224 = vmatpush.msra.mxu0 0.0
    %1225 = vmatpush.msra.mxu0 0.0
    %1226 = vmatpush.msra.mxu0 0.0
    %1227 = vmatpush.msra.mxu0 0.0
    %1228 = vmatpush.msra.mxu0 0.0
    %1229 = vmatpush.msra.mxu0 0.0
    %1230 = vmatpush.msra.mxu0 %v789
    %1231 = vmatmul.f32.gmra.mxu0 %v1213
    %v1232 = vpop.f32.mrf.mxu0
    %v1233 = vadd.f32 0.0, %v1232
    %1234 = vdwg.mxu0
    %v1236 = vsel %vm846, %v1139, 0
    %1238 = vmatpush.msra.mxu0 0.0
    %1239 = vmatpush.msra.mxu0 0.0
    %1240 = vmatpush.msra.mxu0 0.0
    %1241 = vmatpush.msra.mxu0 0.0
    %1242 = vmatpush.msra.mxu0 0.0
    %1243 = vmatpush.msra.mxu0 0.0
    %1244 = vmatpush.msra.mxu0 0.0
    %1245 = vmatpush.msra.mxu0 0.0
    %1246 = vmatpush.msra.mxu0 0.0
    %1247 = vmatpush.msra.mxu0 0.0
    %1248 = vmatpush.msra.mxu0 0.0
    %1249 = vmatpush.msra.mxu0 0.0
    %1250 = vmatpush.msra.mxu0 0.0
    %1251 = vmatpush.msra.mxu0 0.0
    %1252 = vmatpush.msra.mxu0 0.0
    %1253 = vmatpush.msra.mxu0 %v839
    %1254 = vmatmul.f32.gmra.mxu0 %v1236
    %v1255 = vpop.f32.mrf.mxu0
    %v1256 = vadd.f32 0.0, %v1255
    %1257 = vdwg.mxu0
    %v1259 = vsel %vm846, %v1140, 0
    %1261 = vmatpush.msra.mxu0 0.0
    %1262 = vmatpush.msra.mxu0 0.0
    %1263 = vmatpush.msra.mxu0 0.0
    %1264 = vmatpush.msra.mxu0 0.0
    %1265 = vmatpush.msra.mxu0 0.0
    %1266 = vmatpush.msra.mxu0 0.0
    %1267 = vmatpush.msra.mxu0 0.0
    %1268 = vmatpush.msra.mxu0 0.0
    %1269 = vmatpush.msra.mxu0 0.0
    %1270 = vmatpush.msra.mxu0 0.0
    %1271 = vmatpush.msra.mxu0 0.0
    %1272 = vmatpush.msra.mxu0 0.0
    %1273 = vmatpush.msra.mxu0 0.0
    %1274 = vmatpush.msra.mxu0 0.0
    %1275 = vmatpush.msra.mxu0 0.0
    %1276 = vmatpush.msra.mxu0 %v841
    %1277 = vmatmul.f32.gmra.mxu0 %v1259
    %v1278 = vpop.f32.mrf.mxu0
    %v1279 = vadd.f32 0.0, %v1278
    %1280 = vdwg.mxu0
    %v1282 = vsel %vm846, %v1141, 0
    %1284 = vmatpush.msra.mxu0 0.0
    %1285 = vmatpush.msra.mxu0 0.0
    %1286 = vmatpush.msra.mxu0 0.0
    %1287 = vmatpush.msra.mxu0 0.0
    %1288 = vmatpush.msra.mxu0 0.0
    %1289 = vmatpush.msra.mxu0 0.0
    %1290 = vmatpush.msra.mxu0 0.0
    %1291 = vmatpush.msra.mxu0 0.0
    %1292 = vmatpush.msra.mxu0 0.0
    %1293 = vmatpush.msra.mxu0 0.0
    %1294 = vmatpush.msra.mxu0 0.0
    %1295 = vmatpush.msra.mxu0 0.0
    %1296 = vmatpush.msra.mxu0 0.0
    %1297 = vmatpush.msra.mxu0 0.0
    %1298 = vmatpush.msra.mxu0 0.0
    %1299 = vmatpush.msra.mxu0 %v843
    %1300 = vmatmul.f32.gmra.mxu0 %v1282
    %v1301 = vpop.f32.mrf.mxu0
    %v1302 = vadd.f32 0.0, %v1301
    %1303 = vdwg.mxu0
    %v1305 = vsel %vm846, %v1142, 0
    %1307 = vmatpush.msra.mxu0 0.0
    %1308 = vmatpush.msra.mxu0 0.0
    %1309 = vmatpush.msra.mxu0 0.0
    %1310 = vmatpush.msra.mxu0 0.0
    %1311 = vmatpush.msra.mxu0 0.0
    %1312 = vmatpush.msra.mxu0 0.0
    %1313 = vmatpush.msra.mxu0 0.0
    %1314 = vmatpush.msra.mxu0 0.0
    %1315 = vmatpush.msra.mxu0 0.0
    %1316 = vmatpush.msra.mxu0 0.0
    %1317 = vmatpush.msra.mxu0 0.0
    %1318 = vmatpush.msra.mxu0 0.0
    %1319 = vmatpush.msra.mxu0 0.0
    %1320 = vmatpush.msra.mxu0 0.0
    %1321 = vmatpush.msra.mxu0 0.0
    %1322 = vmatpush.msra.mxu0 %v845
    %1323 = vmatmul.f32.gmra.mxu0 %v1305
    %v1324 = vpop.f32.mrf.mxu0
    %v1325 = vadd.f32 0.0, %v1324
    %1326 = vdwg.mxu0
    %v1327 = vrot.slane %v1210, 4
    %v1328 = vsel %vm124, %v1327, %v1164
    %v1329 = vrot.slane %v1164, 4
    %v1330 = vsel %vm124, %v1210, %v1329
    %v1332 = vunpack.c.l.s4 1983009808
    %v1333 = vunpack.c.0.s8 %v1332
    %v1334 = vperm.slane %v1328, %v1333
    %v1336 = vunpack.c.l.s4 1983009808
    %v1337 = vunpack.c.0.s8 %v1336
    %v1338 = vperm.slane %v1330, %v1337
    %v1339 = vrot.slane %v1233, 4
    %v1340 = vsel %vm124, %v1339, %v1187
    %v1341 = vrot.slane %v1187, 4
    %v1342 = vsel %vm124, %v1233, %v1341
    %v1344 = vunpack.c.l.s4 1983009808
    %v1345 = vunpack.c.0.s8 %v1344
    %v1346 = vperm.slane %v1340, %v1345
    %v1348 = vunpack.c.l.s4 1983009808
    %v1349 = vunpack.c.0.s8 %v1348
    %v1350 = vperm.slane %v1342, %v1349
    %v1351 = vrot.slane %v1346, 4
    %v1352 = vsel %vm124, %v1351, %v1334
    %v1353 = vrot.slane %v1334, 4
    %v1354 = vsel %vm124, %v1346, %v1353
    %v1356 = vunpack.c.l.s4 1934713408
    %v1357 = vunpack.c.0.s8 %v1356
    %v1358 = vperm.slane %v1352, %v1357
    %v1360 = vunpack.c.l.s4 1934713408
    %v1361 = vunpack.c.0.s8 %v1360
    %v1362 = vperm.slane %v1354, %v1361
    %v1363 = vrot.slane %v1350, 4
    %v1364 = vsel %vm124, %v1363, %v1338
    %v1365 = vrot.slane %v1338, 4
    %v1366 = vsel %vm124, %v1350, %v1365
    %v1368 = vunpack.c.l.s4 1934713408
    %v1369 = vunpack.c.0.s8 %v1368
    %v1370 = vperm.slane %v1364, %v1369
    %v1372 = vunpack.c.l.s4 1934713408
    %v1373 = vunpack.c.0.s8 %v1372
    %v1374 = vperm.slane %v1366, %v1373
    %v1375 = vrot.slane %v1358, 4
    %v1376 = vsel %vm124, 0.0, %v1375
    %v1377 = vrot.slane %v1362, 4
    %v1378 = vsel %vm124, 0.0, %v1377
    %v1379 = vrot.slane %v1370, 4
    %v1380 = vsel %vm124, 0.0, %v1379
    %v1381 = vrot.slane %v1374, 4
    %v1382 = vsel %vm124, 0.0, %v1381
    %v1383 = vrot.slane %v1302, 4
    %v1384 = vsel %vm124, %v1383, %v1256
    %v1385 = vrot.slane %v1256, 4
    %v1386 = vsel %vm124, %v1302, %v1385
    %v1388 = vunpack.c.l.s4 1983009808
    %v1389 = vunpack.c.0.s8 %v1388
    %v1390 = vperm.slane %v1384, %v1389
    %v1392 = vunpack.c.l.s4 1983009808
    %v1393 = vunpack.c.0.s8 %v1392
    %v1394 = vperm.slane %v1386, %v1393
    %v1395 = vrot.slane %v1325, 4
    %v1396 = vsel %vm124, %v1395, %v1279
    %v1397 = vrot.slane %v1279, 4
    %v1398 = vsel %vm124, %v1325, %v1397
    %v1400 = vunpack.c.l.s4 1983009808
    %v1401 = vunpack.c.0.s8 %v1400
    %v1402 = vperm.slane %v1396, %v1401
    %v1404 = vunpack.c.l.s4 1983009808
    %v1405 = vunpack.c.0.s8 %v1404
    %v1406 = vperm.slane %v1398, %v1405
    %v1407 = vrot.slane %v1402, 4
    %v1408 = vsel %vm124, %v1407, %v1390
    %v1409 = vrot.slane %v1390, 4
    %v1410 = vsel %vm124, %v1402, %v1409
    %v1412 = vunpack.c.l.s4 1934713408
    %v1413 = vunpack.c.0.s8 %v1412
    %v1414 = vperm.slane %v1408, %v1413
    %v1416 = vunpack.c.l.s4 1934713408
    %v1417 = vunpack.c.0.s8 %v1416
    %v1418 = vperm.slane %v1410, %v1417
    %v1419 = vrot.slane %v1406, 4
    %v1420 = vsel %vm124, %v1419, %v1394
    %v1421 = vrot.slane %v1394, 4
    %v1422 = vsel %vm124, %v1406, %v1421
    %v1424 = vunpack.c.l.s4 1934713408
    %v1425 = vunpack.c.0.s8 %v1424
    %v1426 = vperm.slane %v1420, %v1425
    %v1428 = vunpack.c.l.s4 1934713408
    %v1429 = vunpack.c.0.s8 %v1428
    %v1430 = vperm.slane %v1422, %v1429
    %v1431 = vrot.slane %v1414, 4
    %v1432 = vsel %vm124, 0.0, %v1431
    %v1433 = vrot.slane %v1418, 4
    %v1434 = vsel %vm124, 0.0, %v1433
    %v1435 = vrot.slane %v1426, 4
    %v1436 = vsel %vm124, 0.0, %v1435
    %v1437 = vrot.slane %v1430, 4
    %v1438 = vsel %vm124, 0.0, %v1437
    %v1439 = vrot.slane %v1376, 4
    %v1440 = vsel %vm124, %v1439, %v1358
    %v1442 = vunpack.c.l.s4 1983009808
    %v1443 = vunpack.c.0.s8 %v1442
    %v1444 = vperm.slane %v1440, %v1443
    %v1445 = vrot.slane %v1432, 4
    %v1446 = vsel %vm124, %v1445, %v1414
    %v1448 = vunpack.c.l.s4 1983009808
    %v1449 = vunpack.c.0.s8 %v1448
    %v1450 = vperm.slane %v1446, %v1449
    %v1451 = vrot.slane %v1378, 4
    %v1452 = vsel %vm124, %v1451, %v1362
    %v1454 = vunpack.c.l.s4 1983009808
    %v1455 = vunpack.c.0.s8 %v1454
    %v1456 = vperm.slane %v1452, %v1455
    %v1457 = vrot.slane %v1434, 4
    %v1458 = vsel %vm124, %v1457, %v1418
    %v1460 = vunpack.c.l.s4 1983009808
    %v1461 = vunpack.c.0.s8 %v1460
    %v1462 = vperm.slane %v1458, %v1461
    %v1463 = vrot.slane %v1450, 4
    %v1464 = vsel %vm124, %v1463, %v1444
    %v1465 = vrot.slane %v1444, 4
    %v1466 = vsel %vm124, %v1450, %v1465
    %v1468 = vunpack.c.l.s4 1934713408
    %v1469 = vunpack.c.0.s8 %v1468
    %v1470 = vperm.slane %v1464, %v1469
    %v1472 = vunpack.c.l.s4 1934713408
    %v1473 = vunpack.c.0.s8 %v1472
    %v1474 = vperm.slane %v1466, %v1473
    %v1475 = vrot.slane %v1462, 4
    %v1476 = vsel %vm124, %v1475, %v1456
    %v1477 = vrot.slane %v1456, 4
    %v1478 = vsel %vm124, %v1462, %v1477
    %v1480 = vunpack.c.l.s4 1934713408
    %v1481 = vunpack.c.0.s8 %v1480
    %v1482 = vperm.slane %v1476, %v1481
    %v1484 = vunpack.c.l.s4 1934713408
    %v1485 = vunpack.c.0.s8 %v1484
    %v1486 = vperm.slane %v1478, %v1485
    %v1487 = vrot.slane %v1482, 4
    %v1488 = vsel %vm124, %v1487, %v1470
    %v1489 = vrot.slane %v1470, 4
    %v1490 = vsel %vm124, %v1482, %v1489
    %v1491 = vrot.slane %v1486, 4
    %v1492 = vsel %vm124, %v1491, %v1474
    %v1493 = vrot.slane %v1474, 4
    %v1494 = vsel %vm124, %v1486, %v1493
    %v1495 = vrot.slane %v1380, 4
    %v1496 = vsel %vm124, %v1495, %v1370
    %v1498 = vunpack.c.l.s4 1983009808
    %v1499 = vunpack.c.0.s8 %v1498
    %v1500 = vperm.slane %v1496, %v1499
    %v1501 = vrot.slane %v1436, 4
    %v1502 = vsel %vm124, %v1501, %v1426
    %v1504 = vunpack.c.l.s4 1983009808
    %v1505 = vunpack.c.0.s8 %v1504
    %v1506 = vperm.slane %v1502, %v1505
    %v1507 = vrot.slane %v1382, 4
    %v1508 = vsel %vm124, %v1507, %v1374
    %v1510 = vunpack.c.l.s4 1983009808
    %v1511 = vunpack.c.0.s8 %v1510
    %v1512 = vperm.slane %v1508, %v1511
    %v1513 = vrot.slane %v1438, 4
    %v1514 = vsel %vm124, %v1513, %v1430
    %v1516 = vunpack.c.l.s4 1983009808
    %v1517 = vunpack.c.0.s8 %v1516
    %v1518 = vperm.slane %v1514, %v1517
    %v1519 = vrot.slane %v1506, 4
    %v1520 = vsel %vm124, %v1519, %v1500
    %v1521 = vrot.slane %v1500, 4
    %v1522 = vsel %vm124, %v1506, %v1521
    %v1524 = vunpack.c.l.s4 1934713408
    %v1525 = vunpack.c.0.s8 %v1524
    %v1526 = vperm.slane %v1520, %v1525
    %v1528 = vunpack.c.l.s4 1934713408
    %v1529 = vunpack.c.0.s8 %v1528
    %v1530 = vperm.slane %v1522, %v1529
    %v1531 = vrot.slane %v1518, 4
    %v1532 = vsel %vm124, %v1531, %v1512
    %v1533 = vrot.slane %v1512, 4
    %v1534 = vsel %vm124, %v1518, %v1533
    %v1536 = vunpack.c.l.s4 1934713408
    %v1537 = vunpack.c.0.s8 %v1536
    %v1538 = vperm.slane %v1532, %v1537
    %v1540 = vunpack.c.l.s4 1934713408
    %v1541 = vunpack.c.0.s8 %v1540
    %v1542 = vperm.slane %v1534, %v1541
    %v1543 = vrot.slane %v1538, 4
    %v1544 = vsel %vm124, %v1543, %v1526
    %v1545 = vrot.slane %v1526, 4
    %v1546 = vsel %vm124, %v1538, %v1545
    %v1547 = vrot.slane %v1542, 4
    %v1548 = vsel %vm124, %v1547, %v1530
    %v1549 = vrot.slane %v1530, 4
    %v1550 = vsel %vm124, %v1542, %v1549
    %1553 = vrot.lane.b32.xlu0 %v1490, 8
    %v1554 = vpop.permute.xlu0 %1553
    %1555 = vrot.lane.b32.xlu0 %v1546, 8
    %v1556 = vpop.permute.xlu0 %1555
    %1561 = vrot.lane.b32.xlu0 %v1492, 16
    %v1562 = vpop.permute.xlu0 %1561
    %1563 = vrot.lane.b32.xlu0 %v1548, 16
    %v1564 = vpop.permute.xlu0 %1563
    %1569 = vrot.lane.b32.xlu0 %v1494, 24
    %v1570 = vpop.permute.xlu0 %1569
    %1571 = vrot.lane.b32.xlu0 %v1550, 24
    %v1572 = vpop.permute.xlu0 %1571
    %v1575 = vsel %vm846, %v1488, %v1554
    %v1576 = vsel %vm846, %v1544, %v1556
    %vm1577 = vcmask 130048
    %v1578 = vsel %vm1577, %v1575, %v1562
    %v1579 = vsel %vm1577, %v1576, %v1564
    %vm1580 = vcmask 195584
    %v1581 = vsel %vm1580, %v1578, %v1570
    %v1582 = vsel %vm1580, %v1579, %v1572
    %v1583 = vld [vmem:[%s3] sm:$0xff]
    %v1584 = vld [vmem:[%s3 + $0x8] sm:$0xff]
    %v1585 = vld [vmem:[%s3 + $0x10] sm:$0xff]
    %v1586 = vld [vmem:[%s3 + $0x18] sm:$0xff]
    %v1587 = vld [vmem:[%s4] sm:$0x1]
    %v1589 = vperm.slane %v1587, 0
    %v1592 = vsel %vm71, %v1581, 0
    %v1595 = vsel %vm71, %v1582, 0
    %1597 = vmatpush.msra.mxu0 0.0
    %1598 = vmatpush.msra.mxu0 0.0
    %1599 = vmatpush.msra.mxu0 0.0
    %1600 = vmatpush.msra.mxu0 0.0
    %1601 = vmatpush.msra.mxu0 0.0
    %1602 = vmatpush.msra.mxu0 0.0
    %1603 = vmatpush.msra.mxu0 0.0
    %1604 = vmatpush.msra.mxu0 0.0
    %1605 = vmatpush.msra.mxu0 0.0
    %1606 = vmatpush.msra.mxu0 0.0
    %1607 = vmatpush.msra.mxu0 0.0
    %1608 = vmatpush.msra.mxu0 0.0
    %1609 = vmatpush.msra.mxu0 %v1586
    %1610 = vmatpush.msra.mxu0 %v1585
    %1611 = vmatpush.msra.mxu0 %v1584
    %1612 = vmatpush.msra.mxu0 %v1583
    %1613 = vmatmul.f32.gmra.mxu0 %v1592
    %v1614 = vpop.f32.mrf.mxu0
    %v1615 = vadd.f32 %v1589, %v1614
    %1616 = vmatmul.f32.gmra.mxu0 %v1595
    %v1617 = vpop.f32.mrf.mxu0
    %v1618 = vadd.f32 %v1589, %v1617
    %1619 = vdwg.mxu0
    %v1620 = vadd.f32 %v61, %v1615
    %v1621 = vadd.f32 %v62, %v1618
    %v1622 = vld [vmem:[%s5] sm:$0x1]
    %v1623 = vld [vmem:[%s6] sm:$0x1]
    %v1624 = vsel %vm71, %v1620, 0.0
    %1625 = vadd.xlane.f32.xlu0 %v1624
    %v1626 = vpop.xlane.xlu0 %1625
    %v1627 = vsel %vm71, %v1621, 0.0
    %1628 = vadd.xlane.f32.xlu0 %v1627
    %v1629 = vpop.xlane.xlu0 %1628
    %v1630 = vrcp.pop 32.0
    %v1631 = vmul.f32 32.0, %v1630
    %v1632 = vsub.f32 1.0, %v1631
    %v1633 = vmul.f32 %v1630, %v1632
    %v1634 = vadd.f32 %v1630, %v1633
    %vm1635 = vweird.f32 %v1630
    %v1636 = vsel %vm1635, %v1630, %v1634
    %v1637 = vmul.f32 %v1626, %v1636
    %v1638 = vmul.f32 %v1629, %v1636
    %v1639 = vsub.f32 %v1620, %v1637
    %v1640 = vsub.f32 %v1621, %v1638
    %v1641 = vmul.f32 %v1639, %v1639
    %v1642 = vmul.f32 %v1640, %v1640
    %v1643 = vsel %vm71, %v1641, 0.0
    %1644 = vadd.xlane.f32.xlu0 %v1643
    %v1645 = vpop.xlane.xlu0 %1644
    %v1646 = vsel %vm71, %v1642, 0.0
    %1647 = vadd.xlane.f32.xlu0 %v1646
    %v1648 = vpop.xlane.xlu0 %1647
    %v1649 = vmul.f32 %v1645, %v1636
    %v1650 = vmul.f32 %v1648, %v1636
    %v1651 = vadd.f32 %v1649, 1e-05
    %v1652 = vadd.f32 %v1650, 1e-05
    %v1653 = vrsqrt.pop %v1651
    %v1654 = vmul.f32 %v1653, %v1651
    %v1655 = vmul.f32 %v1654, %v1653
    %v1656 = vmul.f32 0.5, %v1655
    %v1657 = vsub.f32 1.5, %v1656
    %v1658 = vmul.f32 %v1653, %v1657
    %vm1659 = vweird.f32 %v1651
    %vm1660 = vweird.f32 %v1653
    %vm1661 = vmor %vm1659, %vm1660
    %v1662 = vsel %vm1661, %v1653, %v1658
    %v1663 = vrsqrt.pop %v1652
    %v1664 = vmul.f32 %v1663, %v1652
    %v1665 = vmul.f32 %v1664, %v1663
    %v1666 = vmul.f32 0.5, %v1665
    %v1667 = vsub.f32 1.5, %v1666
    %v1668 = vmul.f32 %v1663, %v1667
    %vm1669 = vweird.f32 %v1652
    %vm1670 = vweird.f32 %v1663
    %vm1671 = vmor %vm1669, %vm1670
    %v1672 = vsel %vm1671, %v1663, %v1668
    %v1673 = vmul.f32 %v1639, %v1662
    %v1674 = vmul.f32 %v1640, %v1672
    %v1676 = vperm.slane %v1622, 0
    %v1678 = vmul.f32 %v1673, %v1676
    %v1679 = vmul.f32 %v1674, %v1676
    %v1681 = vperm.slane %v1623, 0
    %v1683 = vadd.f32 %v1678, %v1681
    %v1684 = vadd.f32 %v1679, %v1681
    %v1685 = vld [vmem:[%s7] sm:$0xff]
    %v1686 = vld [vmem:[%s7 + $0x8] sm:$0xff]
    %v1687 = vld [vmem:[%s7 + $0x10] sm:$0xff]
    %v1688 = vld [vmem:[%s7 + $0x18] sm:$0xff]
    %v1689 = vld [vmem:[%s8] sm:$0x1]
    %v1691 = vperm.slane %v1689, 0
    %v1694 = vsel %vm71, %v1683, 0
    %v1697 = vsel %vm71, %v1684, 0
    %1699 = vmatpush.msra.mxu0 0.0
    %1700 = vmatpush.msra.mxu0 0.0
    %1701 = vmatpush.msra.mxu0 0.0
    %1702 = vmatpush.msra.mxu0 0.0
    %1703 = vmatpush.msra.mxu0 0.0
    %1704 = vmatpush.msra.mxu0 0.0
    %1705 = vmatpush.msra.mxu0 0.0
    %1706 = vmatpush.msra.mxu0 0.0
    %1707 = vmatpush.msra.mxu0 0.0
    %1708 = vmatpush.msra.mxu0 0.0
    %1709 = vmatpush.msra.mxu0 0.0
    %1710 = vmatpush.msra.mxu0 0.0
    %1711 = vmatpush.msra.mxu0 %v1688
    %1712 = vmatpush.msra.mxu0 %v1687
    %1713 = vmatpush.msra.mxu0 %v1686
    %1714 = vmatpush.msra.mxu0 %v1685
    %1715 = vmatmul.f32.gmra.mxu0 %v1694
    %v1716 = vpop.f32.mrf.mxu0
    %v1717 = vadd.f32 %v1691, %v1716
    %1718 = vmatmul.f32.gmra.mxu0 %v1697
    %v1719 = vpop.f32.mrf.mxu0
    %v1720 = vadd.f32 %v1691, %v1719
    %1721 = vdwg.mxu0
    %v1722 = vmax.f32 %v1717, 0.0
    %v1723 = vmax.f32 %v1720, 0.0
    %v1724 = vld [vmem:[%s9] sm:$0xff]
    %v1725 = vld [vmem:[%s9 + $0x8] sm:$0xff]
    %v1726 = vld [vmem:[%s9 + $0x10] sm:$0xff]
    %v1727 = vld [vmem:[%s9 + $0x18] sm:$0xff]
    %v1728 = vld [vmem:[%s9 + $0x20] sm:$0xff]
    %v1729 = vld [vmem:[%s9 + $0x28] sm:$0xff]
    %v1730 = vld [vmem:[%s9 + $0x30] sm:$0xff]
    %v1731 = vld [vmem:[%s9 + $0x38] sm:$0xff]
    %v1732 = vld [vmem:[%s10] sm:$0x1]
    %v1734 = vperm.slane %v1732, 0
    %vm1736 = vcmask 523264
    %v1738 = vsel %vm1736, %v1722, 0
    %v1741 = vsel %vm1736, %v1723, 0
    %1743 = vmatpush.msra.mxu0 0.0
    %1744 = vmatpush.msra.mxu0 0.0
    %1745 = vmatpush.msra.mxu0 0.0
    %1746 = vmatpush.msra.mxu0 0.0
    %1747 = vmatpush.msra.mxu0 0.0
    %1748 = vmatpush.msra.mxu0 0.0
    %1749 = vmatpush.msra.mxu0 0.0
    %1750 = vmatpush.msra.mxu0 0.0
    %1751 = vmatpush.msra.mxu0 %v1731
    %1752 = vmatpush.msra.mxu0 %v1730
    %1753 = vmatpush.msra.mxu0 %v1729
    %1754 = vmatpush.msra.mxu0 %v1728
    %1755 = vmatpush.msra.mxu0 %v1727
    %1756 = vmatpush.msra.mxu0 %v1726
    %1757 = vmatpush.msra.mxu0 %v1725
    %1758 = vmatpush.msra.mxu0 %v1724
    %1759 = vmatmul.f32.gmra.mxu0 %v1738
    %v1760 = vpop.f32.mrf.mxu0
    %v1761 = vadd.f32 %v1734, %v1760
    %1762 = vmatmul.f32.gmra.mxu0 %v1741
    %v1763 = vpop.f32.mrf.mxu0
    %v1764 = vadd.f32 %v1734, %v1763
    %1765 = vdwg.mxu0
    %v1766 = vadd.f32 %v1683, %v1761
    %v1767 = vadd.f32 %v1684, %v1764
    %v1768 = vld [vmem:[%s11] sm:$0x1]
    %v1769 = vld [vmem:[%s12] sm:$0x1]
    %v1770 = vsel %vm71, %v1766, 0.0
    %1771 = vadd.xlane.f32.xlu0 %v1770
    %v1772 = vpop.xlane.xlu0 %1771
    %v1773 = vsel %vm71, %v1767, 0.0
    %1774 = vadd.xlane.f32.xlu0 %v1773
    %v1775 = vpop.xlane.xlu0 %1774
    %v1776 = vmul.f32 %v1772, %v1636
    %v1777 = vmul.f32 %v1775, %v1636
    %v1778 = vsub.f32 %v1766, %v1776
    %v1779 = vsub.f32 %v1767, %v1777
    %v1780 = vmul.f32 %v1778, %v1778
    %v1781 = vmul.f32 %v1779, %v1779
    %v1782 = vsel %vm71, %v1780, 0.0
    %1783 = vadd.xlane.f32.xlu0 %v1782
    %v1784 = vpop.xlane.xlu0 %1783
    %v1785 = vsel %vm71, %v1781, 0.0
    %1786 = vadd.xlane.f32.xlu0 %v1785
    %v1787 = vpop.xlane.xlu0 %1786
    %v1788 = vmul.f32 %v1784, %v1636
    %v1789 = vmul.f32 %v1787, %v1636
    %v1790 = vadd.f32 %v1788, 1e-05
    %v1791 = vadd.f32 %v1789, 1e-05
    %v1792 = vrsqrt.pop %v1790
    %v1793 = vmul.f32 %v1792, %v1790
    %v1794 = vmul.f32 %v1793, %v1792
    %v1795 = vmul.f32 0.5, %v1794
    %v1796 = vsub.f32 1.5, %v1795
    %v1797 = vmul.f32 %v1792, %v1796
    %vm1798 = vweird.f32 %v1790
    %vm1799 = vweird.f32 %v1792
    %vm1800 = vmor %vm1798, %vm1799
    %v1801 = vsel %vm1800, %v1792, %v1797
    %v1802 = vrsqrt.pop %v1791
    %v1803 = vmul.f32 %v1802, %v1791
    %v1804 = vmul.f32 %v1803, %v1802
    %v1805 = vmul.f32 0.5, %v1804
    %v1806 = vsub.f32 1.5, %v1805
    %v1807 = vmul.f32 %v1802, %v1806
    %vm1808 = vweird.f32 %v1791
    %vm1809 = vweird.f32 %v1802
    %vm1810 = vmor %vm1808, %vm1809
    %v1811 = vsel %vm1810, %v1802, %v1807
    %v1812 = vmul.f32 %v1778, %v1801
    %v1813 = vmul.f32 %v1779, %v1811
    %v1815 = vperm.slane %v1768, 0
    %v1817 = vmul.f32 %v1812, %v1815
    %v1818 = vmul.f32 %v1813, %v1815
    %v1820 = vperm.slane %v1769, 0
    %v1822 = vadd.f32 %v1817, %v1820
    %v1823 = vadd.f32 %v1818, %v1820
    %1824 = vst.msk [vmem:[#allocation5] sm:$0xff] %vm71, %v1822
    %1825 = vst.msk [vmem:[#allocation5 + $0x8] sm:$0xff] %vm71, %v1823
    // Predicated region
    $region58: #{tpu_custom_call.1} parent=1 // pred_check
      _
    $region59: #{tpu_custom_call.1} parent=1 // pred_check_branch
      %1827 = sbr.rel (0) target = $region61
    $region60: #{tpu_custom_call.1} parent=1 // pred_region
      %1829 = vsyncadd [#allocation4], 0
      %s1830 = sshll.u32 [#allocation5], 4
      %s1831 = int_to_ptr.vmem [resolvable:$true] %s1830
      %s1832 = sshll.u32 %s13, 4
      %s1833 = int_to_ptr.hbm [resolvable:$true] %s1832
      %1838 = dma.vmem_to_hbm [thread:$0]  %s1831, 256, %s1833, [#allocation4], 128, 128, 8
    $region61: #{tpu_custom_call.1} parent=1 // pred_fallthru
      _
    // Predicated region
    $region62: #{tpu_custom_call.1} parent=1 // pred_check
      _
    $region63: #{tpu_custom_call.1} parent=1 // pred_check_branch
      %1840 = sbr.rel (0) target = $region65
    $region64: #{tpu_custom_call.1} parent=1 // pred_region
      %1842 = dma.done [#allocation4], 256
    $region65: #{tpu_custom_call.1} parent=1 // pred_fallthru
      _
    %1843 = vsyncpa [#allocation3], 1
    %1844 = vsyncpa [#allocation4], 1

</llo_original>
